<compile_context>
chip_gen: v6e
topology: v6e:2x2x1
jax: 0.10.0
libtpu: 0.0.40
codegen_flags: <defaults>
</compile_context>

<pallas_src>
import functools
import math

import jax
import jax.numpy as jnp
from jax import lax
from jax.experimental import pallas as pl
from jax.experimental.pallas import tpu as pltpu


def _emau_kernel(x_ref, w1_ref, b1_ref, w2_ref, bn_scale_ref, bn_bias_ref,
                 mu0_ref, out_ref, z_ref, *, stage_num):
    # One grid step == one batch element; everything in (C, N) layout.
    x_in = x_ref[0]                               # (C, N) f32, original features (idn)
    w1 = w1_ref[...]                              # (C, C) bf16  conv1.weight
    w2 = w2_ref[...]                              # (C, C) bf16  conv2.weight (no bias)
    b1 = b1_ref[...]                              # (C, 1) f32   conv1.bias

    # conv1 (1x1 conv with bias): xf = W1 @ x + b1   -> (C, N)
    xf = jnp.dot(w1, x_in.astype(jnp.bfloat16),
                 preferred_element_type=jnp.float32) + b1
    xf_bf = xf.astype(jnp.bfloat16)               # (C, N) -- the only EM operand

    def em_step(mu_t):
        # mu_t: (K, C) f32 (bases carried transposed -> lane-dense logits).
        # logits: (K, C) @ (C, N) -> (K, N); N fills the MXU output lanes.
        logits = jnp.dot(mu_t.astype(jnp.bfloat16), xf_bf,
                         preferred_element_type=jnp.float32)
        logits = logits - jnp.max(logits, axis=0, keepdims=True)
        ez = jnp.exp(logits)
        z = ez * pl.reciprocal(jnp.sum(ez, axis=0, keepdims=True),
                               approx=True)                        # (K, N)
        # Pixel normalization folded into the mu update:
        #   xf @ (z * diag(r)) == (xf @ z) * diag(r)
        s = jnp.sum(z, axis=1, keepdims=True)                      # (K, 1)
        mu_raw = lax.dot_general(                                  # contract N axes
            z.astype(jnp.bfloat16), xf_bf,
            dimension_numbers=(((1,), (1,)), ((), ())),
            preferred_element_type=jnp.float32)                    # (K, C)
        mu_new = mu_raw * (1.0 / (1e-6 + s))                       # exact, tiny
        # l2-norm over the channel axis, exact f32 on the tiny (K, C) state.
        norm = jnp.sqrt(jnp.sum(mu_new * mu_new, axis=1, keepdims=True))
        mu_new = mu_new * (1.0 / (1e-6 + norm))
        return z, mu_new

    # EM iterations (torch.no_grad() region): fori_loop carries only mu (K, C);
    # the last stage runs outside the loop so its z is the one returned.
    mu_t = mu0_ref[...]                           # (K, C) f32
    mu_t = lax.fori_loop(0, stage_num - 1, lambda _, m: em_step(m)[1], mu_t)
    z, mu_t = em_step(mu_t)                       # z: (K, N), mu_t: (K, C)

    # x = mu @ z_t : (C, K) @ (K, N) -> (C, N). Only a tiny (K, C) transpose.
    y = jnp.dot(mu_t.T.astype(jnp.bfloat16), z.astype(jnp.bfloat16),
                preferred_element_type=jnp.float32)
    y = jnp.maximum(y, 0.0)                                        # ReLU
    # conv2 (1x1, bias=False) + eval-mode SynchronizedBatchNorm2d (folded)
    y = jnp.dot(w2, y.astype(jnp.bfloat16),
                preferred_element_type=jnp.float32)
    y = y * bn_scale_ref[...] + bn_bias_ref[...]
    y = jnp.maximum(y + x_in, 0.0)                                 # + idn, ReLU

    out_ref[0] = y
    z_ref[0] = z                                  # already (K, N) -- no transpose


def emau_forward(x_nchw, params, *, stage_num=4):
    """Runs the EMAU forward pass. Returns (out_nchw, z_t) like the PyTorch module."""
    assert stage_num >= 1
    b, c, h, w = x_nchw.shape
    n = h * w
    k = params["mu"].shape[-1]

    # NCHW -> (B, C, N) is a free reshape (channel-major layout, no transpose).
    x_bcn = x_nchw.reshape(b, c, n)

    # MXU operands in bf16 (halves weight DMA, bf16-native MXU on all gens);
    # bias / BN / mu kept in f32. mu is passed pre-transposed as (K, C).
    w1 = params["w1"].astype(jnp.bfloat16)                    # (C_out, C_in)
    w2 = params["w2"].astype(jnp.bfloat16)
    b1 = params["b1"].reshape(c, 1).astype(jnp.float32)
    bn_scale = (params["bn_gamma"] /
                jnp.sqrt(params["bn_var"] + 1e-5)).reshape(c, 1)
    bn_bias = (params["bn_beta"].reshape(c, 1) -
               params["bn_mean"].reshape(c, 1) * bn_scale)
    mu0_t = params["mu"].T.astype(jnp.float32)                # (K, C)

    kernel = functools.partial(_emau_kernel, stage_num=stage_num)

    # Rough per-batch VMEM residency (double-buffered x/out/z blocks + f32/bf16
    # intermediates), clamped to [32 MiB default, 64 MiB] -- legal on every
    # generation (v7x physical VMEM is 64 MiB/TC).
    vmem_need = 4 * n * (8 * c + 6 * k) + 4 * (4 * c * c + 8 * c + 2 * k * c)
    vmem_limit = min(64 * 1024 * 1024,
                     max(32 * 1024 * 1024, int(vmem_need * 1.25)))

    # Advisory cost hint so XLA schedules neighbors around the kernel sensibly.
    flops = 2 * b * n * (2 * c * c + (2 * stage_num + 1) * c * k)
    transcendentals = b * stage_num * k * n
    bytes_accessed = 4 * b * n * (2 * c + k) + 2 * (2 * c * c + 4 * c + k * c)

    out_bcn, z_t = pl.pallas_call(
        kernel,
        out_shape=(jax.ShapeDtypeStruct((b, c, n), jnp.float32),
                   jax.ShapeDtypeStruct((b, k, n), jnp.float32)),
        grid_spec=pltpu.PrefetchScalarGridSpec(
            num_scalar_prefetch=0,
            grid=(b,),                                    # B>=2 keeps both v7x TCs busy
            in_specs=[
                pl.BlockSpec((1, c, n), lambda i: (i, 0, 0)),   # x (per-batch block)
                pl.BlockSpec((c, c), lambda i: (0, 0)),         # conv1 weight (bf16)
                pl.BlockSpec((c, 1), lambda i: (0, 0)),         # conv1 bias
                pl.BlockSpec((c, c), lambda i: (0, 0)),         # conv2 weight (bf16)
                pl.BlockSpec((c, 1), lambda i: (0, 0)),         # folded BN scale
                pl.BlockSpec((c, 1), lambda i: (0, 0)),         # folded BN shift
                pl.BlockSpec((k, c), lambda i: (0, 0)),         # mu^T (bases, (K,C))
            ],
            out_specs=[
                pl.BlockSpec((1, c, n), lambda i: (i, 0, 0)),   # out == flat NCHW
                pl.BlockSpec((1, k, n), lambda i: (i, 0, 0)),   # z_t (lane-dense N)
            ],
        ),
        compiler_params=pltpu.CompilerParams(
            dimension_semantics=("parallel",),
            vmem_limit_bytes=vmem_limit),
        cost_estimate=pl.CostEstimate(
            flops=flops, transcendentals=transcendentals,
            bytes_accessed=bytes_accessed),
    )(x_bcn, w1, b1, w2, bn_scale, bn_bias, mu0_t)

    out_nchw = out_bcn.reshape(b, c, h, w)                     # free reshape
    return out_nchw, z_t


def emau_reference(x_nchw, params, *, stage_num=4):
    """Pure-JAX f32 reference mirroring the PyTorch forward (for verification)."""
    b, c, h, w = x_nchw.shape
    n = h * w
    idn = x_nchw
    x = jnp.einsum("bchw,oc->bohw", x_nchw, params["w1"]) + \
        params["b1"].reshape(1, c, 1, 1)
    x = x.reshape(b, c, n)                                             # (B, C, N)
    mu = jnp.broadcast_to(params["mu"][None], (b, c, params["mu"].shape[-1]))
    z = None
    for _ in range(stage_num):
        x_t = jnp.transpose(x, (0, 2, 1))                              # (B, N, C)
        z = jax.nn.softmax(jnp.einsum("bnc,bck->bnk", x_t, mu), axis=2)
        z_ = z / (1e-6 + jnp.sum(z, axis=1, keepdims=True))
        mu = jnp.einsum("bcn,bnk->bck", x, z_)
        mu = mu / (1e-6 + jnp.linalg.norm(mu, axis=1, keepdims=True))
    z_t = jnp.transpose(z, (0, 2, 1))                                  # (B, K, N)
    x = jnp.einsum("bck,bkn->bcn", mu, z_t).reshape(b, c, h, w)
    x_ = jnp.maximum(x, 0.0)
    x = jnp.einsum("bchw,oc->bohw", x_, params["w2"])
    scale = params["bn_gamma"] / jnp.sqrt(params["bn_var"] + 1e-5)
    shift = params["bn_beta"] - params["bn_mean"] * scale
    x = x * scale.reshape(1, c, 1, 1) + shift.reshape(1, c, 1, 1)
    x = jnp.maximum(x + idn, 0.0)
    return x, z_t


def make_params(c, k, key):
    k_mu, k_w1, k_b1, k_w2 = jax.random.split(key, 4)
    mu = jax.random.normal(k_mu, (c, k), jnp.float32) * math.sqrt(2.0 / k)
    mu = mu / (1e-6 + jnp.linalg.norm(mu, axis=0, keepdims=True))      # l2norm over C
    w1 = jax.random.normal(k_w1, (c, c), jnp.float32) * math.sqrt(2.0 / c)
    b1 = jax.random.normal(k_b1, (c,), jnp.float32) * 0.01
    w2 = jax.random.normal(k_w2, (c, c), jnp.float32) * math.sqrt(2.0 / c)
    return {
        "mu": mu,
        "w1": w1,                      # conv1.weight (C_out, C_in) for 1x1 conv
        "b1": b1,
        "w2": w2,                      # conv2[0].weight (C_out, C_in), no bias
        "bn_gamma": jnp.ones((c,), jnp.float32),
        "bn_beta": jnp.zeros((c,), jnp.float32),
        "bn_mean": jnp.zeros((c,), jnp.float32),
        "bn_var": jnp.ones((c,), jnp.float32),
    }


if __name__ == "__main__":
    # N = H*W = 256 (multiple of 128 -> lane-dense tiles), B = 2 (even, 2 TCs).
    B, C, H, W, K, STAGES = 2, 64, 16, 16, 32, 4

    key = jax.random.PRNGKey(0)
    k_params, k_x = jax.random.split(key)
    params = make_params(C, K, k_params)
    x = jax.random.normal(k_x, (B, C, H, W), jnp.float32)

    out, z_t = emau_forward(x, params, stage_num=STAGES)
    out, z_t = jax.block_until_ready(out), jax.block_until_ready(z_t)

    out_ref, z_t_ref = emau_reference(x, params, stage_num=STAGES)
    assert out.shape == (B, C, H, W) and z_t.shape == (B, K, H * W)
    # Tolerance accounts for bf16 MXU operands + the approximate EUP reciprocal
    # in the softmax denominator (the reference runs exact f32); the tiny EM
    # state normalizations are exact f32 in the kernel.
    TOL = 5e-2
    assert jnp.allclose(out, out_ref, atol=TOL, rtol=TOL), \
        float(jnp.max(jnp.abs(out - out_ref)))
    assert jnp.allclose(z_t, z_t_ref, atol=TOL, rtol=TOL), \
        float(jnp.max(jnp.abs(z_t - z_t_ref)))

    print("KERNEL_OK")
</pallas_src>

<mosaic_0001>
module attributes {stable_mosaic.version = 11 : i64} {
  func.func @_emau_kernel(%arg0: i32, %arg1: memref<1x64x256xf32, #tpu.memory_space<vmem>>, %arg2: memref<64x64xbf16, #tpu.memory_space<vmem>>, %arg3: memref<64x1xf32, #tpu.memory_space<vmem>>, %arg4: memref<64x64xbf16, #tpu.memory_space<vmem>>, %arg5: memref<64x1xf32, #tpu.memory_space<vmem>>, %arg6: memref<64x1xf32, #tpu.memory_space<vmem>>, %arg7: memref<32x64xf32, #tpu.memory_space<vmem>>, %arg8: memref<1x64x256xf32, #tpu.memory_space<vmem>>, %arg9: memref<1x32x256xf32, #tpu.memory_space<vmem>>) attributes {dimension_semantics = [#tpu.dimension_semantics<parallel>], iteration_bounds = array<i64: 2>, scalar_prefetch = 0 : i64, scratch_operands = 0 : i64, tpu.core_type = #tpu.core_type<tc>, window_params = [{transform_indices = @transform_0, window_bounds = array<i64: 1, 64, 256>}, {pipeline_mode = #tpu.pipeline_mode<synchronous>, transform_indices = @transform_1, window_bounds = array<i64: 64, 64>}, {pipeline_mode = #tpu.pipeline_mode<synchronous>, transform_indices = @transform_2, window_bounds = array<i64: 64, 1>}, {pipeline_mode = #tpu.pipeline_mode<synchronous>, transform_indices = @transform_3, window_bounds = array<i64: 64, 64>}, {pipeline_mode = #tpu.pipeline_mode<synchronous>, transform_indices = @transform_4, window_bounds = array<i64: 64, 1>}, {pipeline_mode = #tpu.pipeline_mode<synchronous>, transform_indices = @transform_5, window_bounds = array<i64: 64, 1>}, {pipeline_mode = #tpu.pipeline_mode<synchronous>, transform_indices = @transform_6, window_bounds = array<i64: 32, 64>}, {transform_indices = @transform_7, window_bounds = array<i64: 1, 64, 256>}, {transform_indices = @transform_8, window_bounds = array<i64: 1, 32, 256>}]} {
    %c0 = arith.constant 0 : index
    %c0_0 = arith.constant 0 : index
    %c0_1 = arith.constant 0 : index
    %0 = vector.load %arg1[%c0, %c0_0, %c0_1] : memref<1x64x256xf32, #tpu.memory_space<vmem>>, vector<1x64x256xf32>
    %1 = vector.shape_cast %0 : vector<1x64x256xf32> to vector<64x256xf32>
    %c0_2 = arith.constant 0 : index
    %c0_3 = arith.constant 0 : index
    %2 = vector.load %arg2[%c0_2, %c0_3] : memref<64x64xbf16, #tpu.memory_space<vmem>>, vector<64x64xbf16>
    %c0_4 = arith.constant 0 : index
    %c0_5 = arith.constant 0 : index
    %3 = vector.load %arg4[%c0_4, %c0_5] : memref<64x64xbf16, #tpu.memory_space<vmem>>, vector<64x64xbf16>
    %c0_6 = arith.constant 0 : index
    %c0_7 = arith.constant 0 : index
    %4 = vector.load %arg3[%c0_6, %c0_7] : memref<64x1xf32, #tpu.memory_space<vmem>>, vector<64x1xf32>
    %5 = arith.truncf %1 : vector<64x256xf32> to vector<64x256xbf16>
    %cst = arith.constant dense<0.000000e+00> : vector<64x256xf32>
    %6 = tpu.matmul %2, %5, %cst {dimension_numbers = #tpu.dot_dimension_numbers<[1], [0], [0], [1], [0, 0, 1, 1], [], []>} : vector<64x64xbf16>, vector<64x256xbf16>, vector<64x256xf32> -> vector<64x256xf32>
    %7 = vector.broadcast %4 : vector<64x1xf32> to vector<64x256xf32>
    %8 = arith.addf %6, %7 : vector<64x256xf32>
    %9 = arith.truncf %8 : vector<64x256xf32> to vector<64x256xbf16>
    %c0_8 = arith.constant 0 : index
    %c0_9 = arith.constant 0 : index
    %10 = vector.load %arg7[%c0_8, %c0_9] : memref<32x64xf32, #tpu.memory_space<vmem>>, vector<32x64xf32>
    %c0_i32 = arith.constant 0 : i32
    %c3_i32 = arith.constant 3 : i32
    %11 = arith.addi %c0_i32, %c3_i32 : i32
    %c1_i32 = arith.constant 1 : i32
    %12 = scf.for %arg10 = %c0_i32 to %11 step %c1_i32 iter_args(%arg11 = %10) -> (vector<32x64xf32>)  : i32 {
      %68 = arith.truncf %arg11 : vector<32x64xf32> to vector<32x64xbf16>
      %cst_34 = arith.constant dense<0.000000e+00> : vector<32x256xf32>
      %69 = tpu.matmul %68, %9, %cst_34 {dimension_numbers = #tpu.dot_dimension_numbers<[1], [0], [0], [1], [0, 0, 1, 1], [], []>} : vector<32x64xbf16>, vector<64x256xbf16>, vector<32x256xf32> -> vector<32x256xf32>
      %cst_35 = arith.constant dense<0xFF800000> : vector<256xf32>
      %70 = vector.multi_reduction <maximumf>, %69, %cst_35 [0] : vector<32x256xf32> to vector<256xf32>
      %71 = vector.shape_cast %70 : vector<256xf32> to vector<1x256xf32>
      %72 = vector.broadcast %71 : vector<1x256xf32> to vector<32x256xf32>
      %73 = arith.subf %69, %72 : vector<32x256xf32>
      %74 = math.exp %73 : vector<32x256xf32>
      %cst_36 = arith.constant dense<0.000000e+00> : vector<256xf32>
      %75 = vector.multi_reduction <add>, %74, %cst_36 [0] : vector<32x256xf32> to vector<256xf32>
      %76 = vector.shape_cast %75 : vector<256xf32> to vector<1x256xf32>
      %77 = tpu.reciprocal %76 {approx = true} : vector<1x256xf32> -> vector<1x256xf32>
      %78 = vector.broadcast %77 : vector<1x256xf32> to vector<32x256xf32>
      %79 = arith.mulf %74, %78 : vector<32x256xf32>
      %cst_37 = arith.constant dense<0.000000e+00> : vector<32xf32>
      %80 = vector.multi_reduction <add>, %79, %cst_37 [1] : vector<32x256xf32> to vector<32xf32>
      %81 = vector.shape_cast %80 : vector<32xf32> to vector<32x1xf32>
      %82 = arith.truncf %79 : vector<32x256xf32> to vector<32x256xbf16>
      %cst_38 = arith.constant dense<0.000000e+00> : vector<32x64xf32>
      %83 = tpu.matmul %82, %9, %cst_38 {dimension_numbers = #tpu.dot_dimension_numbers<[1], [1], [0], [0], [0, 0, 1, 0], [], []>} : vector<32x256xbf16>, vector<64x256xbf16>, vector<32x64xf32> -> vector<32x64xf32>
      %cst_39 = arith.constant 9.99999997E-7 : f32
      %84 = vector.broadcast %cst_39 : f32 to vector<32x1xf32>
      %85 = arith.addf %84, %81 : vector<32x1xf32>
      %cst_40 = arith.constant 1.000000e+00 : f32
      %86 = vector.broadcast %cst_40 : f32 to vector<32x1xf32>
      %87 = arith.divf %86, %85 : vector<32x1xf32>
      %88 = vector.broadcast %87 : vector<32x1xf32> to vector<32x64xf32>
      %89 = arith.mulf %83, %88 : vector<32x64xf32>
      %90 = arith.mulf %89, %89 : vector<32x64xf32>
      %cst_41 = arith.constant dense<0.000000e+00> : vector<32xf32>
      %91 = vector.multi_reduction <add>, %90, %cst_41 [1] : vector<32x64xf32> to vector<32xf32>
      %92 = vector.shape_cast %91 : vector<32xf32> to vector<32x1xf32>
      %93 = math.sqrt %92 : vector<32x1xf32>
      %cst_42 = arith.constant 9.99999997E-7 : f32
      %94 = vector.broadcast %cst_42 : f32 to vector<32x1xf32>
      %95 = arith.addf %94, %93 : vector<32x1xf32>
      %cst_43 = arith.constant 1.000000e+00 : f32
      %96 = vector.broadcast %cst_43 : f32 to vector<32x1xf32>
      %97 = arith.divf %96, %95 : vector<32x1xf32>
      %98 = vector.broadcast %97 : vector<32x1xf32> to vector<32x64xf32>
      %99 = arith.mulf %89, %98 : vector<32x64xf32>
      scf.yield %99 : vector<32x64xf32>
    }
    %13 = arith.truncf %12 : vector<32x64xf32> to vector<32x64xbf16>
    %cst_10 = arith.constant dense<0.000000e+00> : vector<32x256xf32>
    %14 = tpu.matmul %13, %9, %cst_10 {dimension_numbers = #tpu.dot_dimension_numbers<[1], [0], [0], [1], [0, 0, 1, 1], [], []>} : vector<32x64xbf16>, vector<64x256xbf16>, vector<32x256xf32> -> vector<32x256xf32>
    %cst_11 = arith.constant dense<0xFF800000> : vector<256xf32>
    %15 = vector.multi_reduction <maximumf>, %14, %cst_11 [0] : vector<32x256xf32> to vector<256xf32>
    %16 = vector.shape_cast %15 : vector<256xf32> to vector<1x256xf32>
    %17 = vector.broadcast %16 : vector<1x256xf32> to vector<32x256xf32>
    %18 = arith.subf %14, %17 : vector<32x256xf32>
    %19 = math.exp %18 : vector<32x256xf32>
    %cst_12 = arith.constant dense<0.000000e+00> : vector<256xf32>
    %20 = vector.multi_reduction <add>, %19, %cst_12 [0] : vector<32x256xf32> to vector<256xf32>
    %21 = vector.shape_cast %20 : vector<256xf32> to vector<1x256xf32>
    %22 = tpu.reciprocal %21 {approx = true} : vector<1x256xf32> -> vector<1x256xf32>
    %23 = vector.broadcast %22 : vector<1x256xf32> to vector<32x256xf32>
    %24 = arith.mulf %19, %23 : vector<32x256xf32>
    %cst_13 = arith.constant dense<0.000000e+00> : vector<32xf32>
    %25 = vector.multi_reduction <add>, %24, %cst_13 [1] : vector<32x256xf32> to vector<32xf32>
    %26 = vector.shape_cast %25 : vector<32xf32> to vector<32x1xf32>
    %27 = arith.truncf %24 : vector<32x256xf32> to vector<32x256xbf16>
    %cst_14 = arith.constant dense<0.000000e+00> : vector<32x64xf32>
    %28 = tpu.matmul %27, %9, %cst_14 {dimension_numbers = #tpu.dot_dimension_numbers<[1], [1], [0], [0], [0, 0, 1, 0], [], []>} : vector<32x256xbf16>, vector<64x256xbf16>, vector<32x64xf32> -> vector<32x64xf32>
    %cst_15 = arith.constant 9.99999997E-7 : f32
    %29 = vector.broadcast %cst_15 : f32 to vector<32x1xf32>
    %30 = arith.addf %29, %26 : vector<32x1xf32>
    %cst_16 = arith.constant 1.000000e+00 : f32
    %31 = vector.broadcast %cst_16 : f32 to vector<32x1xf32>
    %32 = arith.divf %31, %30 : vector<32x1xf32>
    %33 = vector.broadcast %32 : vector<32x1xf32> to vector<32x64xf32>
    %34 = arith.mulf %28, %33 : vector<32x64xf32>
    %35 = arith.mulf %34, %34 : vector<32x64xf32>
    %cst_17 = arith.constant dense<0.000000e+00> : vector<32xf32>
    %36 = vector.multi_reduction <add>, %35, %cst_17 [1] : vector<32x64xf32> to vector<32xf32>
    %37 = vector.shape_cast %36 : vector<32xf32> to vector<32x1xf32>
    %38 = math.sqrt %37 : vector<32x1xf32>
    %cst_18 = arith.constant 9.99999997E-7 : f32
    %39 = vector.broadcast %cst_18 : f32 to vector<32x1xf32>
    %40 = arith.addf %39, %38 : vector<32x1xf32>
    %cst_19 = arith.constant 1.000000e+00 : f32
    %41 = vector.broadcast %cst_19 : f32 to vector<32x1xf32>
    %42 = arith.divf %41, %40 : vector<32x1xf32>
    %43 = vector.broadcast %42 : vector<32x1xf32> to vector<32x64xf32>
    %44 = arith.mulf %34, %43 : vector<32x64xf32>
    %45 = tpu.transpose %44, [1, 0] : vector<32x64xf32> -> vector<64x32xf32>
    %46 = arith.truncf %45 : vector<64x32xf32> to vector<64x32xbf16>
    %47 = arith.truncf %24 : vector<32x256xf32> to vector<32x256xbf16>
    %cst_20 = arith.constant dense<0.000000e+00> : vector<64x256xf32>
    %48 = tpu.matmul %46, %47, %cst_20 {dimension_numbers = #tpu.dot_dimension_numbers<[1], [0], [0], [1], [0, 0, 1, 1], [], []>} : vector<64x32xbf16>, vector<32x256xbf16>, vector<64x256xf32> -> vector<64x256xf32>
    %cst_21 = arith.constant 0.000000e+00 : f32
    %49 = vector.broadcast %cst_21 : f32 to vector<64x256xf32>
    %50 = arith.maximumf %48, %49 : vector<64x256xf32>
    %51 = arith.truncf %50 : vector<64x256xf32> to vector<64x256xbf16>
    %cst_22 = arith.constant dense<0.000000e+00> : vector<64x256xf32>
    %52 = tpu.matmul %3, %51, %cst_22 {dimension_numbers = #tpu.dot_dimension_numbers<[1], [0], [0], [1], [0, 0, 1, 1], [], []>} : vector<64x64xbf16>, vector<64x256xbf16>, vector<64x256xf32> -> vector<64x256xf32>
    %c0_23 = arith.constant 0 : index
    %c0_24 = arith.constant 0 : index
    %53 = vector.load %arg5[%c0_23, %c0_24] : memref<64x1xf32, #tpu.memory_space<vmem>>, vector<64x1xf32>
    %54 = vector.broadcast %53 : vector<64x1xf32> to vector<64x256xf32>
    %55 = arith.mulf %52, %54 : vector<64x256xf32>
    %c0_25 = arith.constant 0 : index
    %c0_26 = arith.constant 0 : index
    %56 = vector.load %arg6[%c0_25, %c0_26] : memref<64x1xf32, #tpu.memory_space<vmem>>, vector<64x1xf32>
    %57 = vector.broadcast %56 : vector<64x1xf32> to vector<64x256xf32>
    %58 = arith.addf %55, %57 : vector<64x256xf32>
    %59 = arith.addf %58, %1 : vector<64x256xf32>
    %cst_27 = arith.constant 0.000000e+00 : f32
    %60 = vector.broadcast %cst_27 : f32 to vector<64x256xf32>
    %61 = arith.maximumf %59, %60 : vector<64x256xf32>
    %c0_28 = arith.constant 0 : index
    %c0_29 = arith.constant 0 : index
    %c0_30 = arith.constant 0 : index
    %62 = vector.load %arg8[%c0_28, %c0_29, %c0_30] : memref<1x64x256xf32, #tpu.memory_space<vmem>>, vector<1x64x256xf32>
    %63 = vector.shape_cast %62 : vector<1x64x256xf32> to vector<64x256xf32>
    %64 = vector.shape_cast %61 : vector<64x256xf32> to vector<1x64x256xf32>
    tpu.vector_store %arg8[%c0_28, %c0_29, %c0_30], %64 {strides = array<i32>} : memref<1x64x256xf32, #tpu.memory_space<vmem>>, vector<1x64x256xf32>,
    %c0_31 = arith.constant 0 : index
    %c0_32 = arith.constant 0 : index
    %c0_33 = arith.constant 0 : index
    %65 = vector.load %arg9[%c0_31, %c0_32, %c0_33] : memref<1x32x256xf32, #tpu.memory_space<vmem>>, vector<1x32x256xf32>
    %66 = vector.shape_cast %65 : vector<1x32x256xf32> to vector<32x256xf32>
    %67 = vector.shape_cast %24 : vector<32x256xf32> to vector<1x32x256xf32>
    tpu.vector_store %arg9[%c0_31, %c0_32, %c0_33], %67 {strides = array<i32>} : memref<1x32x256xf32, #tpu.memory_space<vmem>>, vector<1x32x256xf32>,
    return
  }
  func.func @transform_0(%arg0: i32) -> (i32, i32, i32) {
    %c0_i32 = arith.constant 0 : i32
    %c0_i32_0 = arith.constant 0 : i32
    %c0_i32_1 = arith.constant 0 : i32
    return %arg0, %c0_i32, %c0_i32_0 : i32, i32, i32
  }
  func.func @transform_1(%arg0: i32) -> (i32, i32) {
    %c0_i32 = arith.constant 0 : i32
    %c0_i32_0 = arith.constant 0 : i32
    %c0_i32_1 = arith.constant 0 : i32
    return %c0_i32, %c0_i32_0 : i32, i32
  }
  func.func @transform_2(%arg0: i32) -> (i32, i32) {
    %c0_i32 = arith.constant 0 : i32
    %c0_i32_0 = arith.constant 0 : i32
    %c0_i32_1 = arith.constant 0 : i32
    return %c0_i32, %c0_i32_0 : i32, i32
  }
  func.func @transform_3(%arg0: i32) -> (i32, i32) {
    %c0_i32 = arith.constant 0 : i32
    %c0_i32_0 = arith.constant 0 : i32
    %c0_i32_1 = arith.constant 0 : i32
    return %c0_i32, %c0_i32_0 : i32, i32
  }
  func.func @transform_4(%arg0: i32) -> (i32, i32) {
    %c0_i32 = arith.constant 0 : i32
    %c0_i32_0 = arith.constant 0 : i32
    %c0_i32_1 = arith.constant 0 : i32
    return %c0_i32, %c0_i32_0 : i32, i32
  }
  func.func @transform_5(%arg0: i32) -> (i32, i32) {
    %c0_i32 = arith.constant 0 : i32
    %c0_i32_0 = arith.constant 0 : i32
    %c0_i32_1 = arith.constant 0 : i32
    return %c0_i32, %c0_i32_0 : i32, i32
  }
  func.func @transform_6(%arg0: i32) -> (i32, i32) {
    %c0_i32 = arith.constant 0 : i32
    %c0_i32_0 = arith.constant 0 : i32
    %c0_i32_1 = arith.constant 0 : i32
    return %c0_i32, %c0_i32_0 : i32, i32
  }
  func.func @transform_7(%arg0: i32) -> (i32, i32, i32) {
    %c0_i32 = arith.constant 0 : i32
    %c0_i32_0 = arith.constant 0 : i32
    %c0_i32_1 = arith.constant 0 : i32
    return %arg0, %c0_i32, %c0_i32_0 : i32, i32, i32
  }
  func.func @transform_8(%arg0: i32) -> (i32, i32, i32) {
    %c0_i32 = arith.constant 0 : i32
    %c0_i32_0 = arith.constant 0 : i32
    %c0_i32_1 = arith.constant 0 : i32
    return %arg0, %c0_i32, %c0_i32_0 : i32, i32, i32
  }
}

</mosaic_0001>

<llo_original>
// kernel: tpu_custom_call.1
$region0: #{tpu_custom_call.1}
  #allocation0 [shape = 'u32[]', space=smem, size = 0x4, offset = 0x4, fixed_abs, tag = 'smem constant byte address 0x4 - core index']
  #allocation1 [shape = 'u32[144,128]{1,0:T(1,128)}', space=vmem, size = 0x12000, scoped, tag = 'internal scratch']
  %s0 = inlined_call_operand.hbm [shape: f32[2,64,256], index: 0, kind: input, shape index: {}]
  %s1 = inlined_call_operand.vmem [shape: bf16[64,64], index: 1, kind: input, shape index: {}]
  %s2 = inlined_call_operand.vmem [shape: f32[64,1], index: 2, kind: input, shape index: {}]
  %s3 = inlined_call_operand.vmem [shape: bf16[64,64], index: 3, kind: input, shape index: {}]
  %s4 = inlined_call_operand.vmem [shape: f32[64,1], index: 4, kind: input, shape index: {}]
  %s5 = inlined_call_operand.vmem [shape: f32[64,1], index: 5, kind: input, shape index: {}]
  %s6 = inlined_call_operand.vmem [shape: f32[32,64], index: 6, kind: input, shape index: {}]
  %s7 = inlined_call_operand.hbm [shape: f32[2,64,256], index: 7, kind: output, shape index: {0}]
  %s8 = inlined_call_operand.hbm [shape: f32[2,32,256], index: 8, kind: output, shape index: {1}]
  %9 = xla_tuple %s7, %s8
  %s10 = sld [smem:[#allocation0]]
  $region80: #{tpu_custom_call.1} parent=0
    _
  %s12 = ssub.s32 1, %s10
  %s13 = scalar_select 0, %s12, %s10
  $region1: #{tpu_custom_call.1} parent=0
    #allocation2 [shape = 'u8[131072]{0}', space=vmem, size = 0x20000, scoped, tag = 'input window, operand 0']
    #allocation3 [shape = 's32[2]{0}', space=sflag, size = 0x8, scoped, tag = 'scoped memory for tpu_custom_call.1']
    #allocation4 [shape = 's32[2]{0}', space=sflag, size = 0x8, scoped, tag = 'scoped memory for tpu_custom_call.1']
    #allocation5 [shape = 'u8[131072]{0}', space=vmem, size = 0x20000, scoped, tag = 'output window, operand 0']
    #allocation6 [shape = 'u8[65536]{0}', space=vmem, size = 0x10000, scoped, tag = 'output window, operand 1']
    #allocation7 [shape = 's32[2]{0}', space=sflag, size = 0x8, scoped, tag = 'scoped memory for tpu_custom_call.1']
    %14 = vsyncpa [#allocation3], 0
    %s15 = scalar_lea.sflag [#allocation3], 1
    %16 = vsyncpa %s15, 0
    %17 = vsyncpa [#allocation4], 0
    %s18 = scalar_lea.sflag [#allocation4], 1
    %19 = vsyncpa %s18, 0
    %20 = vsyncpa [#allocation7], 0
    %s21 = scalar_lea.sflag [#allocation7], 1
    %22 = vsyncpa %s21, 0
    loop: start=0, step=1, limit=4
    $region2: #{tpu_custom_call.1} parent=1 // loop_pre_header
      _
    $region3: #{tpu_custom_call.1} parent=1 // loop_header
      %s24 = sphi 0, %s28
      %p25 = scmp.ge.s32.totalorder %s24, 4
      %s34 = sphi 0, %s36
      %s37 = sphi 0, %s34
      %s38 = sphi 0, %s37
      %s54 = sphi 0, %s38
      %s58 = sphi 0, %s58
      %s60 = sphi 0, %s58
      %s61 = sphi 0, %s60
      %s75 = sphi 0, %s61
      %s79 = sphi 0, %s79
      %s81 = sphi 0, %s79
      %s82 = sphi 0, %s81
      %s96 = sphi 0, %s82
      %s100 = sphi 0, %s100
      %s102 = sphi 0, %s100
      %s103 = sphi 0, %s102
      %s117 = sphi 0, %s103
      %s121 = sphi 0, %s121
      %s123 = sphi 0, %s121
      %s124 = sphi 0, %s123
      %s138 = sphi 0, %s124
      %s142 = sphi 0, %s142
      %s144 = sphi 0, %s142
      %s145 = sphi 0, %s144
      %s159 = sphi 0, %s145
      %s163 = sphi 0, %s163
      %s165 = sphi 0, %s163
      %s166 = sphi 0, %s165
      %s180 = sphi 0, %s166
      %s186 = sphi 0, %s188
      %s189 = sphi 0, %s186
      %s190 = sphi 0, %s189
      %s206 = sphi 0, %s190
      %s212 = sphi 0, %s214
      %s215 = sphi 0, %s212
      %s216 = sphi 0, %s215
      %s232 = sphi 0, %s216
    $region4: #{tpu_custom_call.1} parent=1 // loop_header_branch
      %27 = sbr.rel (%p25) target = $region8
    $region5: #{tpu_custom_call.1} parent=1 // loop_body
      %s29 = ssub.s32 %s24, 1
      %s30 = ssub.s32 %s24, 2
      %s31 = sadd.s32 %s24, 1
      %s32 = ssub.s32 %s24, %s31
      %p33 = scmp.eq.s32.totalorder %s32, 0
      %s35 = sadd.s32 %s34, 1
      %s36 = scalar_select %p33, %s34, %s35
      %p39 = pneg %p33
      %p40 = scmp.eq.s32.totalorder %s24, 1
      %p41 = por %p39, %p40
      %p42 = scmp.ne.s32.totalorder %s34, %s37
      %p43 = scmp.eq.s32.totalorder %s24, 0
      %p44 = por %p42, %p43
      %p45 = scmp.ne.s32.totalorder %s34, %s37
      %p46 = scmp.eq.s32.totalorder %s29, 1
      %p47 = por %p45, %p46
      %p48 = scmp.ne.s32.totalorder %s37, %s38
      %p49 = scmp.eq.s32.totalorder %s29, 0
      %p50 = por %p48, %p49
      %p51 = scmp.ne.s32.totalorder %s37, %s38
      %p52 = scmp.eq.s32.totalorder %s30, 1
      %p53 = por %p51, %p52
      %p55 = scmp.ne.s32.totalorder %s38, %s54
      %p56 = scmp.eq.s32.totalorder %s30, 0
      %p57 = por %p55, %p56
      %s59 = sadd.s32 %s58, 1
      %p62 = scmp.eq.s32.totalorder %s24, 1
      %p63 = scmp.ne.s32.totalorder %s58, %s60
      %p64 = scmp.eq.s32.totalorder %s24, 0
      %p65 = por %p63, %p64
      %p66 = scmp.ne.s32.totalorder %s58, %s60
      %p67 = scmp.eq.s32.totalorder %s29, 1
      %p68 = por %p66, %p67
      %p69 = scmp.ne.s32.totalorder %s60, %s61
      %p70 = scmp.eq.s32.totalorder %s29, 0
      %p71 = por %p69, %p70
      %p72 = scmp.ne.s32.totalorder %s60, %s61
      %p73 = scmp.eq.s32.totalorder %s30, 1
      %p74 = por %p72, %p73
      %p76 = scmp.ne.s32.totalorder %s61, %s75
      %p77 = scmp.eq.s32.totalorder %s30, 0
      %p78 = por %p76, %p77
      %s80 = sadd.s32 %s79, 1
      %p83 = scmp.eq.s32.totalorder %s24, 1
      %p84 = scmp.ne.s32.totalorder %s79, %s81
      %p85 = scmp.eq.s32.totalorder %s24, 0
      %p86 = por %p84, %p85
      %p87 = scmp.ne.s32.totalorder %s79, %s81
      %p88 = scmp.eq.s32.totalorder %s29, 1
      %p89 = por %p87, %p88
      %p90 = scmp.ne.s32.totalorder %s81, %s82
      %p91 = scmp.eq.s32.totalorder %s29, 0
      %p92 = por %p90, %p91
      %p93 = scmp.ne.s32.totalorder %s81, %s82
      %p94 = scmp.eq.s32.totalorder %s30, 1
      %p95 = por %p93, %p94
      %p97 = scmp.ne.s32.totalorder %s82, %s96
      %p98 = scmp.eq.s32.totalorder %s30, 0
      %p99 = por %p97, %p98
      %s101 = sadd.s32 %s100, 1
      %p104 = scmp.eq.s32.totalorder %s24, 1
      %p105 = scmp.ne.s32.totalorder %s100, %s102
      %p106 = scmp.eq.s32.totalorder %s24, 0
      %p107 = por %p105, %p106
      %p108 = scmp.ne.s32.totalorder %s100, %s102
      %p109 = scmp.eq.s32.totalorder %s29, 1
      %p110 = por %p108, %p109
      %p111 = scmp.ne.s32.totalorder %s102, %s103
      %p112 = scmp.eq.s32.totalorder %s29, 0
      %p113 = por %p111, %p112
      %p114 = scmp.ne.s32.totalorder %s102, %s103
      %p115 = scmp.eq.s32.totalorder %s30, 1
      %p116 = por %p114, %p115
      %p118 = scmp.ne.s32.totalorder %s103, %s117
      %p119 = scmp.eq.s32.totalorder %s30, 0
      %p120 = por %p118, %p119
      %s122 = sadd.s32 %s121, 1
      %p125 = scmp.eq.s32.totalorder %s24, 1
      %p126 = scmp.ne.s32.totalorder %s121, %s123
      %p127 = scmp.eq.s32.totalorder %s24, 0
      %p128 = por %p126, %p127
      %p129 = scmp.ne.s32.totalorder %s121, %s123
      %p130 = scmp.eq.s32.totalorder %s29, 1
      %p131 = por %p129, %p130
      %p132 = scmp.ne.s32.totalorder %s123, %s124
      %p133 = scmp.eq.s32.totalorder %s29, 0
      %p134 = por %p132, %p133
      %p135 = scmp.ne.s32.totalorder %s123, %s124
      %p136 = scmp.eq.s32.totalorder %s30, 1
      %p137 = por %p135, %p136
      %p139 = scmp.ne.s32.totalorder %s124, %s138
      %p140 = scmp.eq.s32.totalorder %s30, 0
      %p141 = por %p139, %p140
      %s143 = sadd.s32 %s142, 1
      %p146 = scmp.eq.s32.totalorder %s24, 1
      %p147 = scmp.ne.s32.totalorder %s142, %s144
      %p148 = scmp.eq.s32.totalorder %s24, 0
      %p149 = por %p147, %p148
      %p150 = scmp.ne.s32.totalorder %s142, %s144
      %p151 = scmp.eq.s32.totalorder %s29, 1
      %p152 = por %p150, %p151
      %p153 = scmp.ne.s32.totalorder %s144, %s145
      %p154 = scmp.eq.s32.totalorder %s29, 0
      %p155 = por %p153, %p154
      %p156 = scmp.ne.s32.totalorder %s144, %s145
      %p157 = scmp.eq.s32.totalorder %s30, 1
      %p158 = por %p156, %p157
      %p160 = scmp.ne.s32.totalorder %s145, %s159
      %p161 = scmp.eq.s32.totalorder %s30, 0
      %p162 = por %p160, %p161
      %s164 = sadd.s32 %s163, 1
      %p167 = scmp.eq.s32.totalorder %s24, 1
      %p168 = scmp.ne.s32.totalorder %s163, %s165
      %p169 = scmp.eq.s32.totalorder %s24, 0
      %p170 = por %p168, %p169
      %p171 = scmp.ne.s32.totalorder %s163, %s165
      %p172 = scmp.eq.s32.totalorder %s29, 1
      %p173 = por %p171, %p172
      %p174 = scmp.ne.s32.totalorder %s165, %s166
      %p175 = scmp.eq.s32.totalorder %s29, 0
      %p176 = por %p174, %p175
      %p177 = scmp.ne.s32.totalorder %s165, %s166
      %p178 = scmp.eq.s32.totalorder %s30, 1
      %p179 = por %p177, %p178
      %p181 = scmp.ne.s32.totalorder %s166, %s180
      %p182 = scmp.eq.s32.totalorder %s30, 0
      %p183 = por %p181, %p182
      %s184 = ssub.s32 %s24, %s31
      %p185 = scmp.eq.s32.totalorder %s184, 0
      %s187 = sadd.s32 %s186, 1
      %s188 = scalar_select %p185, %s186, %s187
      %p191 = pneg %p185
      %p192 = scmp.eq.s32.totalorder %s24, 1
      %p193 = por %p191, %p192
      %p194 = scmp.ne.s32.totalorder %s186, %s189
      %p195 = scmp.eq.s32.totalorder %s24, 0
      %p196 = por %p194, %p195
      %p197 = scmp.ne.s32.totalorder %s186, %s189
      %p198 = scmp.eq.s32.totalorder %s29, 1
      %p199 = por %p197, %p198
      %p200 = scmp.ne.s32.totalorder %s189, %s190
      %p201 = scmp.eq.s32.totalorder %s29, 0
      %p202 = por %p200, %p201
      %p203 = scmp.ne.s32.totalorder %s189, %s190
      %p204 = scmp.eq.s32.totalorder %s30, 1
      %p205 = por %p203, %p204
      %p207 = scmp.ne.s32.totalorder %s190, %s206
      %p208 = scmp.eq.s32.totalorder %s30, 0
      %p209 = por %p207, %p208
      %s210 = ssub.s32 %s24, %s31
      %p211 = scmp.eq.s32.totalorder %s210, 0
      %s213 = sadd.s32 %s212, 1
      %s214 = scalar_select %p211, %s212, %s213
      %p217 = pneg %p211
      %p218 = scmp.eq.s32.totalorder %s24, 1
      %p219 = por %p217, %p218
      %p220 = scmp.ne.s32.totalorder %s212, %s215
      %p221 = scmp.eq.s32.totalorder %s24, 0
      %p222 = por %p220, %p221
      %p223 = scmp.ne.s32.totalorder %s212, %s215
      %p224 = scmp.eq.s32.totalorder %s29, 1
      %p225 = por %p223, %p224
      %p226 = scmp.ne.s32.totalorder %s215, %s216
      %p227 = scmp.eq.s32.totalorder %s29, 0
      %p228 = por %p226, %p227
      %p229 = scmp.ne.s32.totalorder %s215, %s216
      %p230 = scmp.eq.s32.totalorder %s30, 1
      %p231 = por %p229, %p230
      %p233 = scmp.ne.s32.totalorder %s216, %s232
      %p234 = scmp.eq.s32.totalorder %s30, 0
      %p235 = por %p233, %p234
      %p236 = scmp.le.s32.totalorder 1, %s24
      %p237 = scmp.lt.s32.totalorder %s24, 3
      %p238 = pnand %p236, %p237
      %p239 = pneg %p238
      // Predicated region
      $region9: #{tpu_custom_call.1} parent=5 // pred_check
        _
      $region10: #{tpu_custom_call.1} parent=5 // pred_check_branch
        %241 = sbr.rel (%p238) target = $region12
      $region11: #{tpu_custom_call.1} parent=5 // pred_region
        %s242 = ssub.s32 %s24, 1
        // Predicated region
        $region13: #{tpu_custom_call.1} parent=11 // pred_check
          %p243 = pneg %p71
        $region14: #{tpu_custom_call.1} parent=11 // pred_check_branch
          %245 = sbr.rel (%p243) target = $region16
        $region15: #{tpu_custom_call.1} parent=11 // pred_region
          _
        $region16: #{tpu_custom_call.1} parent=11 // pred_fallthru
          _
        // Predicated region
        $region17: #{tpu_custom_call.1} parent=11 // pred_check
          %p246 = pneg %p92
        $region18: #{tpu_custom_call.1} parent=11 // pred_check_branch
          %248 = sbr.rel (%p246) target = $region20
        $region19: #{tpu_custom_call.1} parent=11 // pred_region
          _
        $region20: #{tpu_custom_call.1} parent=11 // pred_fallthru
          _
        // Predicated region
        $region21: #{tpu_custom_call.1} parent=11 // pred_check
          %p249 = pneg %p113
        $region22: #{tpu_custom_call.1} parent=11 // pred_check_branch
          %251 = sbr.rel (%p249) target = $region24
        $region23: #{tpu_custom_call.1} parent=11 // pred_region
          _
        $region24: #{tpu_custom_call.1} parent=11 // pred_fallthru
          _
        // Predicated region
        $region25: #{tpu_custom_call.1} parent=11 // pred_check
          %p252 = pneg %p134
        $region26: #{tpu_custom_call.1} parent=11 // pred_check_branch
          %254 = sbr.rel (%p252) target = $region28
        $region27: #{tpu_custom_call.1} parent=11 // pred_region
          _
        $region28: #{tpu_custom_call.1} parent=11 // pred_fallthru
          _
        // Predicated region
        $region29: #{tpu_custom_call.1} parent=11 // pred_check
          %p255 = pneg %p155
        $region30: #{tpu_custom_call.1} parent=11 // pred_check_branch
          %257 = sbr.rel (%p255) target = $region32
        $region31: #{tpu_custom_call.1} parent=11 // pred_region
          _
        $region32: #{tpu_custom_call.1} parent=11 // pred_fallthru
          _
        // Predicated region
        $region33: #{tpu_custom_call.1} parent=11 // pred_check
          %p258 = pneg %p176
        $region34: #{tpu_custom_call.1} parent=11 // pred_check_branch
          %260 = sbr.rel (%p258) target = $region36
        $region35: #{tpu_custom_call.1} parent=11 // pred_region
          _
        $region36: #{tpu_custom_call.1} parent=11 // pred_fallthru
          _
      $region12: #{tpu_custom_call.1} parent=5 // pred_fallthru
        _
      %p261 = scmp.lt.s32.totalorder %s24, 2
      // Predicated region
      $region37: #{tpu_custom_call.1} parent=5 // pred_check
        %p262 = pneg %p261
      $region38: #{tpu_custom_call.1} parent=5 // pred_check_branch
        %264 = sbr.rel (%p262) target = $region40
      $region39: #{tpu_custom_call.1} parent=5 // pred_region
        // Predicated region
        $region41: #{tpu_custom_call.1} parent=39 // pred_check
          %p265 = pneg %p44
        $region42: #{tpu_custom_call.1} parent=39 // pred_check_branch
          %267 = sbr.rel (%p265) target = $region44
        $region43: #{tpu_custom_call.1} parent=39 // pred_region
          %s268 = sand.u32 %s34, 1
          %s269 = scalar_lea.sflag [#allocation3], %s268
          %s270 = sand.u32 %s34, 1
          %s271 = smul.addr %s270, 128
          %s272 = scalar_lea.vmem [#allocation2], %s271
          %s274 = ssub.s32 2048, 2048
          %275 = vsyncadd %s269, %s274
          %s276 = smul.addr %s24, 16
          %s277 = smul.addr %s276, 128
          %s278 = scalar_lea.hbm %s0, %s277
          %s279 = sshll.u32 %s272, 4
          %s280 = int_to_ptr.vmem [resolvable:$true] %s279
          %285 = dma.hbm_to_vmem [thread:$0]  %s278, 2048, %s280, %s269, 256, 256, 16
        $region44: #{tpu_custom_call.1} parent=39 // pred_fallthru
          _
      $region40: #{tpu_custom_call.1} parent=5 // pred_fallthru
        _
      %p286 = scmp.le.s32.totalorder 1, %s24
      %p287 = scmp.lt.s32.totalorder %s24, 3
      %p288 = pnand %p286, %p287
      %p289 = pneg %p288
      // Predicated region
      $region45: #{tpu_custom_call.1} parent=5 // pred_check
        _
      $region46: #{tpu_custom_call.1} parent=5 // pred_check_branch
        %291 = sbr.rel (%p288) target = $region48
      $region47: #{tpu_custom_call.1} parent=5 // pred_region
        %s292 = ssub.s32 %s24, 1
        %s293 = sand.u32 %s37, 1
        %s294 = scalar_lea.sflag [#allocation3], %s293
        %s295 = sand.u32 %s37, 1
        %s296 = smul.addr %s295, 128
        %s297 = scalar_lea.vmem [#allocation2], %s296
        // Predicated region
        $region49: #{tpu_custom_call.1} parent=47 // pred_check
          %p298 = pneg %p50
        $region50: #{tpu_custom_call.1} parent=47 // pred_check_branch
          %300 = sbr.rel (%p298) target = $region52
        $region51: #{tpu_custom_call.1} parent=47 // pred_region
          %301 = dma.done %s294, 2048
        $region52: #{tpu_custom_call.1} parent=47 // pred_fallthru
          _
        %s302 = sand.u32 %s37, 1
        %s303 = scalar_lea.sflag [#allocation3], %s302
        %s304 = sand.u32 %s37, 1
        %s305 = smul.addr %s304, 128
        %s306 = scalar_lea.vmem [#allocation2], %s305
        %p307 = pneg %p50
        %p308 = pneg %p47
        %p309 = pneg %p71
        %p310 = pneg %p68
        %p311 = pneg %p92
        %p312 = pneg %p89
        %p313 = pneg %p113
        %p314 = pneg %p110
        %p315 = pneg %p134
        %p316 = pneg %p131
        %p317 = pneg %p155
        %p318 = pneg %p152
        %p319 = pneg %p176
        %p320 = pneg %p173
        %p321 = pneg %p202
        %p322 = pneg %p199
        %s323 = sand.u32 %s189, 1
        %s324 = scalar_lea.sflag [#allocation4], %s323
        %s325 = sand.u32 %s189, 1
        %s326 = smul.addr %s325, 128
        %s327 = scalar_lea.vmem [#allocation5], %s326
        %p328 = pneg %p228
        %p329 = pneg %p225
        %s330 = sand.u32 %s215, 1
        %s331 = scalar_lea.sflag [#allocation7], %s330
        %s332 = sand.u32 %s215, 1
        %s333 = smul.addr %s332, 64
        %s334 = scalar_lea.vmem [#allocation6], %s333
        %v336 = vld [vmem:[%s297] sm:$0xff]
        %v337 = vld [vmem:[%s297 + $0x8] sm:$0xff]
        %v338 = vld [vmem:[%s297 + $0x10] sm:$0xff]
        %v339 = vld [vmem:[%s297 + $0x18] sm:$0xff]
        %v340 = vld [vmem:[%s297 + $0x20] sm:$0xff]
        %v341 = vld [vmem:[%s297 + $0x28] sm:$0xff]
        %v342 = vld [vmem:[%s297 + $0x30] sm:$0xff]
        %v343 = vld [vmem:[%s297 + $0x38] sm:$0xff]
        %v344 = vld [vmem:[%s297 + $0x40] sm:$0xff]
        %v345 = vld [vmem:[%s297 + $0x48] sm:$0xff]
        %v346 = vld [vmem:[%s297 + $0x50] sm:$0xff]
        %v347 = vld [vmem:[%s297 + $0x58] sm:$0xff]
        %v348 = vld [vmem:[%s297 + $0x60] sm:$0xff]
        %v349 = vld [vmem:[%s297 + $0x68] sm:$0xff]
        %v350 = vld [vmem:[%s297 + $0x70] sm:$0xff]
        %v351 = vld [vmem:[%s297 + $0x78] sm:$0xff]
        %v352 = vld [vmem:[%s1] sm:$0xf]
        %v353 = vld [vmem:[%s1 + $0x4] sm:$0xf]
        %v354 = vld [vmem:[%s1 + $0x8] sm:$0xf]
        %v355 = vld [vmem:[%s1 + $0xc] sm:$0xf]
        %v356 = vld [vmem:[%s1 + $0x10] sm:$0xf]
        %v357 = vld [vmem:[%s1 + $0x14] sm:$0xf]
        %v358 = vld [vmem:[%s1 + $0x18] sm:$0xf]
        %v359 = vld [vmem:[%s1 + $0x1c] sm:$0xf]
        %v360 = vld [vmem:[%s3] sm:$0xf]
        %v361 = vld [vmem:[%s3 + $0x4] sm:$0xf]
        %v362 = vld [vmem:[%s3 + $0x8] sm:$0xf]
        %v363 = vld [vmem:[%s3 + $0xc] sm:$0xf]
        %v364 = vld [vmem:[%s3 + $0x10] sm:$0xf]
        %v365 = vld [vmem:[%s3 + $0x14] sm:$0xf]
        %v366 = vld [vmem:[%s3 + $0x18] sm:$0xf]
        %v367 = vld [vmem:[%s3 + $0x1c] sm:$0xf]
        %v368 = vld [vmem:[%s2] sm:$0xff]
        %v369 = vld [vmem:[%s2 + $0x8] sm:$0xff]
        %v370 = vld [vmem:[%s2 + $0x10] sm:$0xff]
        %v371 = vld [vmem:[%s2 + $0x18] sm:$0xff]
        %v372 = vld [vmem:[%s2 + $0x20] sm:$0xff]
        %v373 = vld [vmem:[%s2 + $0x28] sm:$0xff]
        %v374 = vld [vmem:[%s2 + $0x30] sm:$0xff]
        %v375 = vld [vmem:[%s2 + $0x38] sm:$0xff]
        %v376 = vpack.c.bf16 %v338, %v336
        %v377 = vpack.c.bf16 %v339, %v337
        %v378 = vpack.c.bf16 %v342, %v340
        %v379 = vpack.c.bf16 %v343, %v341
        %v380 = vpack.c.bf16 %v346, %v344
        %v381 = vpack.c.bf16 %v347, %v345
        %v382 = vpack.c.bf16 %v350, %v348
        %v383 = vpack.c.bf16 %v351, %v349
        %385 = vset.pattern.permute.xlu0 0
        %386 = vperm.xlu0 %385, %v368
        %v387 = vpop.permute.xlu0 %386
        %390 = vset.pattern.permute.xlu0 0
        %391 = vperm.xlu0 %390, %v369
        %v392 = vpop.permute.xlu0 %391
        %395 = vset.pattern.permute.xlu0 0
        %396 = vperm.xlu0 %395, %v370
        %v397 = vpop.permute.xlu0 %396
        %400 = vset.pattern.permute.xlu0 0
        %401 = vperm.xlu0 %400, %v371
        %v402 = vpop.permute.xlu0 %401
        %405 = vset.pattern.permute.xlu0 0
        %406 = vperm.xlu0 %405, %v372
        %v407 = vpop.permute.xlu0 %406
        %410 = vset.pattern.permute.xlu0 0
        %411 = vperm.xlu0 %410, %v373
        %v412 = vpop.permute.xlu0 %411
        %415 = vset.pattern.permute.xlu0 0
        %416 = vperm.xlu0 %415, %v374
        %v417 = vpop.permute.xlu0 %416
        %420 = vset.pattern.permute.xlu0 0
        %421 = vperm.xlu0 %420, %v375
        %v422 = vpop.permute.xlu0 %421
        %v432 = vunpack.c.l.b16 %v352
        %v433 = vunpack.c.l.b16 %v353
        %v434 = vunpack.c.l.b16 %v354
        %v435 = vunpack.c.l.b16 %v355
        %v436 = vunpack.c.l.b16 %v356
        %v437 = vunpack.c.l.b16 %v357
        %v438 = vunpack.c.l.b16 %v358
        %v439 = vunpack.c.l.b16 %v359
        %v440 = vpack.c.b16 %v433, %v432
        %v441 = vpack.c.b16 %v435, %v434
        %v442 = vpack.c.b16 %v437, %v436
        %v443 = vpack.c.b16 %v439, %v438
        %vm444 = vcmask 523264
        %v446 = vsel %vm444, %v440, 0
        %v449 = vsel %vm444, %v441, 0
        %v452 = vsel %vm444, %v442, 0
        %v455 = vsel %vm444, %v443, 0
        %457 = vmatprep.subr.bf16.mxu0 0
        %458 = vmatpush1.bf16.msra.mxu0 0
        %459 = vmatprep.subr.bf16.mxu0 0
        %460 = vmatpush1.bf16.msra.mxu0 0
        %461 = vmatprep.subr.bf16.mxu0 0
        %462 = vmatpush1.bf16.msra.mxu0 0
        %463 = vmatprep.subr.bf16.mxu0 0
        %464 = vmatpush1.bf16.msra.mxu0 0
        %465 = vmatprep.subr.bf16.mxu0 %v383
        %466 = vmatpush1.bf16.msra.mxu0 %v382
        %467 = vmatprep.subr.bf16.mxu0 %v381
        %468 = vmatpush1.bf16.msra.mxu0 %v380
        %469 = vmatprep.subr.bf16.mxu0 %v379
        %470 = vmatpush1.bf16.msra.mxu0 %v378
        %471 = vmatprep.subr.bf16.mxu0 %v377
        %472 = vmatpush1.bf16.msra.mxu0 %v376
        %473 = vmatprep.subr.bf16.mxu0 0
        %474 = vmatpush2.bf16.msra.mxu0 0
        %475 = vmatprep.subr.bf16.mxu0 0
        %476 = vmatpush2.bf16.msra.mxu0 0
        %477 = vmatprep.subr.bf16.mxu0 0
        %478 = vmatpush2.bf16.msra.mxu0 0
        %479 = vmatprep.subr.bf16.mxu0 0
        %480 = vmatpush2.bf16.msra.mxu0 0
        %481 = vmatprep.subr.bf16.mxu0 0
        %482 = vmatpush2.bf16.msra.mxu0 0
        %483 = vmatprep.subr.bf16.mxu0 0
        %484 = vmatpush2.bf16.msra.mxu0 0
        %485 = vmatprep.subr.bf16.mxu0 0
        %486 = vmatpush2.bf16.msra.mxu0 0
        %487 = vmatprep.subr.bf16.mxu0 0
        %488 = vmatpush2.bf16.msra.mxu0 0
        %489 = vmatprep.mubr.bf16.mxu0 0
        %490 = vmatmul.mubr.bf16.gmra.mxu0 %v446
        %v491 = vpop.f32.mrf.mxu0
        %v492 = vadd.f32 %v387, %v491
        %v493 = vpop.f32.mrf.mxu0
        %v494 = vadd.f32 %v387, %v493
        %v495 = vpop.f32.mrf.mxu0
        %v496 = vadd.f32 %v392, %v495
        %v497 = vpop.f32.mrf.mxu0
        %v498 = vadd.f32 %v392, %v497
        %499 = vmatprep.mubr.bf16.mxu0 0
        %500 = vmatmul.mubr.bf16.gmra.mxu0 %v449
        %v501 = vpop.f32.mrf.mxu0
        %v502 = vadd.f32 %v397, %v501
        %v503 = vpop.f32.mrf.mxu0
        %v504 = vadd.f32 %v397, %v503
        %v505 = vpop.f32.mrf.mxu0
        %v506 = vadd.f32 %v402, %v505
        %v507 = vpop.f32.mrf.mxu0
        %v508 = vadd.f32 %v402, %v507
        %509 = vmatprep.mubr.bf16.mxu0 0
        %510 = vmatmul.mubr.bf16.gmra.mxu0 %v452
        %v511 = vpop.f32.mrf.mxu0
        %v512 = vadd.f32 %v407, %v511
        %v513 = vpop.f32.mrf.mxu0
        %v514 = vadd.f32 %v407, %v513
        %v515 = vpop.f32.mrf.mxu0
        %v516 = vadd.f32 %v412, %v515
        %v517 = vpop.f32.mrf.mxu0
        %v518 = vadd.f32 %v412, %v517
        %519 = vmatprep.mubr.bf16.mxu0 0
        %520 = vmatmul.mubr.bf16.gmra.mxu0 %v455
        %v521 = vpop.f32.mrf.mxu0
        %v522 = vadd.f32 %v417, %v521
        %v523 = vpop.f32.mrf.mxu0
        %v524 = vadd.f32 %v417, %v523
        %v525 = vpop.f32.mrf.mxu0
        %v526 = vadd.f32 %v422, %v525
        %v527 = vpop.f32.mrf.mxu0
        %v528 = vadd.f32 %v422, %v527
        %529 = vdwg.mxu0
        %v530 = vpack.c.bf16 %v496, %v492
        %v531 = vpack.c.bf16 %v498, %v494
        %v532 = vpack.c.bf16 %v506, %v502
        %v533 = vpack.c.bf16 %v508, %v504
        %v534 = vpack.c.bf16 %v516, %v512
        %v535 = vpack.c.bf16 %v518, %v514
        %v536 = vpack.c.bf16 %v526, %v522
        %v537 = vpack.c.bf16 %v528, %v524
        %v538 = vld [vmem:[%s6] sm:$0xff]
        %v539 = vld [vmem:[%s6 + $0x8] sm:$0xff]
        %v540 = vld [vmem:[%s6 + $0x10] sm:$0xff]
        %v541 = vld [vmem:[%s6 + $0x18] sm:$0xff]
        loop: start=0, step=1, limit=3
        $region53: #{tpu_custom_call.1} parent=47 // loop_pre_header
          _
        $region54: #{tpu_custom_call.1} parent=47 // loop_header
          %s543 = sphi 0, %s547
          %p544 = scmp.ge.s32.totalorder %s543, 3
          %v548 = vphi %v538, %v820
          %v549 = vphi %v539, %v821
          %v550 = vphi %v540, %v822
          %v551 = vphi %v541, %v823
        $region55: #{tpu_custom_call.1} parent=47 // loop_header_branch
          %546 = sbr.rel (%p544) target = $region59
        $region56: #{tpu_custom_call.1} parent=47 // loop_body
          %v552 = vpack.c.bf16 %v549, %v548
          %v553 = vpack.c.bf16 %v551, %v550
          %v555 = vsel %vm444, %v552, 0
          %v558 = vsel %vm444, %v553, 0
          %560 = vmatprep.subr.bf16.mxu0 0
          %561 = vmatpush1.bf16.msra.mxu0 0
          %562 = vmatprep.subr.bf16.mxu0 0
          %563 = vmatpush1.bf16.msra.mxu0 0
          %564 = vmatprep.subr.bf16.mxu0 0
          %565 = vmatpush1.bf16.msra.mxu0 0
          %566 = vmatprep.subr.bf16.mxu0 0
          %567 = vmatpush1.bf16.msra.mxu0 0
          %568 = vmatprep.subr.bf16.mxu0 %v537
          %569 = vmatpush1.bf16.msra.mxu0 %v536
          %570 = vmatprep.subr.bf16.mxu0 %v535
          %571 = vmatpush1.bf16.msra.mxu0 %v534
          %572 = vmatprep.subr.bf16.mxu0 %v533
          %573 = vmatpush1.bf16.msra.mxu0 %v532
          %574 = vmatprep.subr.bf16.mxu0 %v531
          %575 = vmatpush1.bf16.msra.mxu0 %v530
          %576 = vmatprep.subr.bf16.mxu0 0
          %577 = vmatpush2.bf16.msra.mxu0 0
          %578 = vmatprep.subr.bf16.mxu0 0
          %579 = vmatpush2.bf16.msra.mxu0 0
          %580 = vmatprep.subr.bf16.mxu0 0
          %581 = vmatpush2.bf16.msra.mxu0 0
          %582 = vmatprep.subr.bf16.mxu0 0
          %583 = vmatpush2.bf16.msra.mxu0 0
          %584 = vmatprep.subr.bf16.mxu0 0
          %585 = vmatpush2.bf16.msra.mxu0 0
          %586 = vmatprep.subr.bf16.mxu0 0
          %587 = vmatpush2.bf16.msra.mxu0 0
          %588 = vmatprep.subr.bf16.mxu0 0
          %589 = vmatpush2.bf16.msra.mxu0 0
          %590 = vmatprep.subr.bf16.mxu0 0
          %591 = vmatpush2.bf16.msra.mxu0 0
          %592 = vmatprep.mubr.bf16.mxu0 0
          %593 = vmatmul.mubr.bf16.gmra.mxu0 %v555
          %v594 = vpop.f32.mrf.mxu0
          %v595 = vadd.f32 0.0, %v594
          %v596 = vpop.f32.mrf.mxu0
          %v597 = vadd.f32 0.0, %v596
          %v598 = vpop.f32.mrf.mxu0
          %v599 = vadd.f32 0.0, %v598
          %v600 = vpop.f32.mrf.mxu0
          %v601 = vadd.f32 0.0, %v600
          %602 = vmatprep.mubr.bf16.mxu0 0
          %603 = vmatmul.mubr.bf16.gmra.mxu0 %v558
          %v604 = vpop.f32.mrf.mxu0
          %v605 = vadd.f32 0.0, %v604
          %v606 = vpop.f32.mrf.mxu0
          %v607 = vadd.f32 0.0, %v606
          %v608 = vpop.f32.mrf.mxu0
          %v609 = vadd.f32 0.0, %v608
          %v610 = vpop.f32.mrf.mxu0
          %v611 = vadd.f32 0.0, %v610
          %612 = vdwg.mxu0
          %v613 = vmax.f32 %v595, %v605
          %v614 = vmax.f32 %v599, %v609
          %v615 = vmax.f32 %v613, %v614
          %v616 = vrot.slane %v615, 4
          %v617 = vmax.f32 %v615, %v616
          %v618 = vrot.slane %v617, 2
          %v619 = vmax.f32 %v617, %v618
          %v620 = vrot.slane %v619, 1
          %v621 = vmax.f32 %v619, %v620
          %v622 = vmax.f32 %v597, %v607
          %v623 = vmax.f32 %v601, %v611
          %v624 = vmax.f32 %v622, %v623
          %v625 = vrot.slane %v624, 4
          %v626 = vmax.f32 %v624, %v625
          %v627 = vrot.slane %v626, 2
          %v628 = vmax.f32 %v626, %v627
          %v629 = vrot.slane %v628, 1
          %v630 = vmax.f32 %v628, %v629
          %v631 = vsub.f32 %v595, %v621
          %v632 = vsub.f32 %v597, %v630
          %v633 = vsub.f32 %v599, %v621
          %v634 = vsub.f32 %v601, %v630
          %v635 = vsub.f32 %v605, %v621
          %v636 = vsub.f32 %v607, %v630
          %v637 = vsub.f32 %v609, %v621
          %v638 = vsub.f32 %v611, %v630
          %v639 = vmul.f32 %v631, 1.442695
          %v640 = vpow.pop %v639
          %v641 = vmul.f32 %v632, 1.442695
          %v642 = vpow.pop %v641
          %v643 = vmul.f32 %v633, 1.442695
          %v644 = vpow.pop %v643
          %v645 = vmul.f32 %v634, 1.442695
          %v646 = vpow.pop %v645
          %v647 = vmul.f32 %v635, 1.442695
          %v648 = vpow.pop %v647
          %v649 = vmul.f32 %v636, 1.442695
          %v650 = vpow.pop %v649
          %v651 = vmul.f32 %v637, 1.442695
          %v652 = vpow.pop %v651
          %v653 = vmul.f32 %v638, 1.442695
          %v654 = vpow.pop %v653
          %v655 = vadd.f32 %v640, %v644
          %v656 = vadd.f32 %v655, %v648
          %v657 = vadd.f32 %v656, %v652
          %v658 = vrot.slane %v657, 4
          %v659 = vadd.f32 %v657, %v658
          %v660 = vrot.slane %v659, 2
          %v661 = vadd.f32 %v659, %v660
          %v662 = vrot.slane %v661, 1
          %v663 = vadd.f32 %v661, %v662
          %v664 = vadd.f32 %v642, %v646
          %v665 = vadd.f32 %v664, %v650
          %v666 = vadd.f32 %v665, %v654
          %v667 = vrot.slane %v666, 4
          %v668 = vadd.f32 %v666, %v667
          %v669 = vrot.slane %v668, 2
          %v670 = vadd.f32 %v668, %v669
          %v671 = vrot.slane %v670, 1
          %v672 = vadd.f32 %v670, %v671
          %v673 = vrcp.pop %v663
          %v674 = vrcp.pop %v672
          %v675 = vmul.f32 %v640, %v673
          %v676 = vmul.f32 %v642, %v674
          %v677 = vmul.f32 %v644, %v673
          %v678 = vmul.f32 %v646, %v674
          %v679 = vmul.f32 %v648, %v673
          %v680 = vmul.f32 %v650, %v674
          %v681 = vmul.f32 %v652, %v673
          %v682 = vmul.f32 %v654, %v674
          %v683 = vadd.f32 %v675, %v676
          %684 = vadd.xlane.f32.xlu0 %v683
          %v685 = vpop.xlane.xlu0 %684
          %v686 = vadd.f32 %v677, %v678
          %687 = vadd.xlane.f32.xlu0 %v686
          %v688 = vpop.xlane.xlu0 %687
          %v689 = vadd.f32 %v679, %v680
          %690 = vadd.xlane.f32.xlu0 %v689
          %v691 = vpop.xlane.xlu0 %690
          %v692 = vadd.f32 %v681, %v682
          %693 = vadd.xlane.f32.xlu0 %v692
          %v694 = vpop.xlane.xlu0 %693
          %v695 = vpack.c.bf16 %v677, %v675
          %v696 = vpack.c.bf16 %v678, %v676
          %v697 = vpack.c.bf16 %v681, %v679
          %v698 = vpack.c.bf16 %v682, %v680
          %699 = vmatprep.subr.bf16.mxu0 0
          %700 = vmatpush1.bf16.xpose.msra.mxu0 0
          %701 = vmatprep.subr.bf16.mxu0 0
          %702 = vmatpush1.bf16.xpose.msra.mxu0 0
          %703 = vmatprep.subr.bf16.mxu0 0
          %704 = vmatpush1.bf16.xpose.msra.mxu0 0
          %705 = vmatprep.subr.bf16.mxu0 0
          %706 = vmatpush1.bf16.xpose.msra.mxu0 0
          %707 = vmatprep.subr.bf16.mxu0 %v537
          %708 = vmatpush1.bf16.xpose.msra.mxu0 %v536
          %709 = vmatprep.subr.bf16.mxu0 %v535
          %710 = vmatpush1.bf16.xpose.msra.mxu0 %v534
          %711 = vmatprep.subr.bf16.mxu0 %v533
          %712 = vmatpush1.bf16.xpose.msra.mxu0 %v532
          %713 = vmatprep.subr.bf16.mxu0 %v531
          %714 = vmatpush1.bf16.xpose.msra.mxu0 %v530
          %715 = vmatprep.subr.bf16.mxu0 0
          %716 = vmatpush2.bf16.xpose.msra.mxu0 0
          %717 = vmatprep.subr.bf16.mxu0 0
          %718 = vmatpush2.bf16.xpose.msra.mxu0 0
          %719 = vmatprep.subr.bf16.mxu0 0
          %720 = vmatpush2.bf16.xpose.msra.mxu0 0
          %721 = vmatprep.subr.bf16.mxu0 0
          %722 = vmatpush2.bf16.xpose.msra.mxu0 0
          %723 = vmatprep.subr.bf16.mxu0 0
          %724 = vmatpush2.bf16.xpose.msra.mxu0 0
          %725 = vmatprep.subr.bf16.mxu0 0
          %726 = vmatpush2.bf16.xpose.msra.mxu0 0
          %727 = vmatprep.subr.bf16.mxu0 0
          %728 = vmatpush2.bf16.xpose.msra.mxu0 0
          %729 = vmatprep.subr.bf16.mxu0 0
          %730 = vmatpush2.bf16.xpose.msra.mxu0 0
          %731 = vmatprep.mubr.bf16.mxu0 %v696
          %732 = vmatmul.mubr.bf16.gmra.mxu0 %v695
          %v733 = vpop.f32.mrf.mxu0
          %v734 = vadd.f32 0.0, %v733
          %v735 = vpop.f32.mrf.mxu0
          %v736 = vpop.f32.mrf.mxu0
          %v737 = vadd.f32 0.0, %v736
          %v738 = vpop.f32.mrf.mxu0
          %739 = vmatprep.mubr.bf16.mxu0 %v698
          %740 = vmatmul.mubr.bf16.gmra.mxu0 %v697
          %v741 = vpop.f32.mrf.mxu0
          %v742 = vadd.f32 0.0, %v741
          %v743 = vpop.f32.mrf.mxu0
          %v744 = vpop.f32.mrf.mxu0
          %v745 = vadd.f32 0.0, %v744
          %v746 = vpop.f32.mrf.mxu0
          %747 = vdwg.mxu0
          %v748 = vadd.f32 %v685, 1e-06
          %v749 = vadd.f32 %v688, 1e-06
          %v750 = vadd.f32 %v691, 1e-06
          %v751 = vadd.f32 %v694, 1e-06
          %v752 = vrcp.pop %v748
          %v753 = vmul.f32 1.0, %v752
          %v754 = vrcp.pop %v749
          %v755 = vmul.f32 1.0, %v754
          %v756 = vrcp.pop %v750
          %v757 = vmul.f32 1.0, %v756
          %v758 = vrcp.pop %v751
          %v759 = vmul.f32 1.0, %v758
          %v760 = vmul.f32 %v734, %v753
          %v761 = vmul.f32 %v737, %v755
          %v762 = vmul.f32 %v742, %v757
          %v763 = vmul.f32 %v745, %v759
          %v764 = vmul.f32 %v760, %v760
          %v765 = vmul.f32 %v761, %v761
          %v766 = vmul.f32 %v762, %v762
          %v767 = vmul.f32 %v763, %v763
          %v768 = vsel %vm444, %v764, 0.0
          %769 = vadd.xlane.f32.xlu0 %v768
          %v770 = vpop.xlane.xlu0 %769
          %v771 = vsel %vm444, %v765, 0.0
          %772 = vadd.xlane.f32.xlu0 %v771
          %v773 = vpop.xlane.xlu0 %772
          %v774 = vsel %vm444, %v766, 0.0
          %775 = vadd.xlane.f32.xlu0 %v774
          %v776 = vpop.xlane.xlu0 %775
          %v777 = vsel %vm444, %v767, 0.0
          %778 = vadd.xlane.f32.xlu0 %v777
          %v779 = vpop.xlane.xlu0 %778
          %v780 = vrsqrt.pop %v770
          %v781 = vmul.f32 %v770, %v780
          %vm782 = vcmp.eq.f32.partialorder %v770, inf
          %v783 = vsel %vm782, %v770, %v781
          %vm784 = vcmp.eq.f32.partialorder %v770, 0.0
          %v785 = vand.u32 %v770, 2147483648
          %v786 = vsel %vm784, %v785, %v783
          %v787 = vrsqrt.pop %v773
          %v788 = vmul.f32 %v773, %v787
          %vm789 = vcmp.eq.f32.partialorder %v773, inf
          %v790 = vsel %vm789, %v773, %v788
          %vm791 = vcmp.eq.f32.partialorder %v773, 0.0
          %v792 = vand.u32 %v773, 2147483648
          %v793 = vsel %vm791, %v792, %v790
          %v794 = vrsqrt.pop %v776
          %v795 = vmul.f32 %v776, %v794
          %vm796 = vcmp.eq.f32.partialorder %v776, inf
          %v797 = vsel %vm796, %v776, %v795
          %vm798 = vcmp.eq.f32.partialorder %v776, 0.0
          %v799 = vand.u32 %v776, 2147483648
          %v800 = vsel %vm798, %v799, %v797
          %v801 = vrsqrt.pop %v779
          %v802 = vmul.f32 %v779, %v801
          %vm803 = vcmp.eq.f32.partialorder %v779, inf
          %v804 = vsel %vm803, %v779, %v802
          %vm805 = vcmp.eq.f32.partialorder %v779, 0.0
          %v806 = vand.u32 %v779, 2147483648
          %v807 = vsel %vm805, %v806, %v804
          %v808 = vadd.f32 %v786, 1e-06
          %v809 = vadd.f32 %v793, 1e-06
          %v810 = vadd.f32 %v800, 1e-06
          %v811 = vadd.f32 %v807, 1e-06
          %v812 = vrcp.pop %v808
          %v813 = vmul.f32 1.0, %v812
          %v814 = vrcp.pop %v809
          %v815 = vmul.f32 1.0, %v814
          %v816 = vrcp.pop %v810
          %v817 = vmul.f32 1.0, %v816
          %v818 = vrcp.pop %v811
          %v819 = vmul.f32 1.0, %v818
          %v820 = vmul.f32 %v760, %v813
          %v821 = vmul.f32 %v761, %v815
          %v822 = vmul.f32 %v762, %v817
          %v823 = vmul.f32 %v763, %v819
        $region57: #{tpu_custom_call.1} parent=47 // loop_footer
          %s547 = sadd.s32 1, %s543
        $region58: #{tpu_custom_call.1} parent=47 // loop_footer_branch
          %542 = sbr.rel target = $region54
        $region59: #{tpu_custom_call.1} parent=47 // loop_exit
          _
        %v824 = vpack.c.bf16 %v549, %v548
        %v825 = vpack.c.bf16 %v551, %v550
        %v827 = vsel %vm444, %v824, 0
        %v830 = vsel %vm444, %v825, 0
        %832 = vmatprep.subr.bf16.mxu0 0
        %833 = vmatpush1.bf16.msra.mxu0 0
        %834 = vmatprep.subr.bf16.mxu0 0
        %835 = vmatpush1.bf16.msra.mxu0 0
        %836 = vmatprep.subr.bf16.mxu0 0
        %837 = vmatpush1.bf16.msra.mxu0 0
        %838 = vmatprep.subr.bf16.mxu0 0
        %839 = vmatpush1.bf16.msra.mxu0 0
        %840 = vmatprep.subr.bf16.mxu0 %v537
        %841 = vmatpush1.bf16.msra.mxu0 %v536
        %842 = vmatprep.subr.bf16.mxu0 %v535
        %843 = vmatpush1.bf16.msra.mxu0 %v534
        %844 = vmatprep.subr.bf16.mxu0 %v533
        %845 = vmatpush1.bf16.msra.mxu0 %v532
        %846 = vmatprep.subr.bf16.mxu0 %v531
        %847 = vmatpush1.bf16.msra.mxu0 %v530
        %848 = vmatprep.subr.bf16.mxu0 0
        %849 = vmatpush2.bf16.msra.mxu0 0
        %850 = vmatprep.subr.bf16.mxu0 0
        %851 = vmatpush2.bf16.msra.mxu0 0
        %852 = vmatprep.subr.bf16.mxu0 0
        %853 = vmatpush2.bf16.msra.mxu0 0
        %854 = vmatprep.subr.bf16.mxu0 0
        %855 = vmatpush2.bf16.msra.mxu0 0
        %856 = vmatprep.subr.bf16.mxu0 0
        %857 = vmatpush2.bf16.msra.mxu0 0
        %858 = vmatprep.subr.bf16.mxu0 0
        %859 = vmatpush2.bf16.msra.mxu0 0
        %860 = vmatprep.subr.bf16.mxu0 0
        %861 = vmatpush2.bf16.msra.mxu0 0
        %862 = vmatprep.subr.bf16.mxu0 0
        %863 = vmatpush2.bf16.msra.mxu0 0
        %864 = vmatprep.mubr.bf16.mxu0 0
        %865 = vmatmul.mubr.bf16.gmra.mxu0 %v827
        %v866 = vpop.f32.mrf.mxu0
        %v867 = vadd.f32 0.0, %v866
        %v868 = vpop.f32.mrf.mxu0
        %v869 = vadd.f32 0.0, %v868
        %v870 = vpop.f32.mrf.mxu0
        %v871 = vadd.f32 0.0, %v870
        %v872 = vpop.f32.mrf.mxu0
        %v873 = vadd.f32 0.0, %v872
        %874 = vmatprep.mubr.bf16.mxu0 0
        %875 = vmatmul.mubr.bf16.gmra.mxu0 %v830
        %v876 = vpop.f32.mrf.mxu0
        %v877 = vadd.f32 0.0, %v876
        %v878 = vpop.f32.mrf.mxu0
        %v879 = vadd.f32 0.0, %v878
        %v880 = vpop.f32.mrf.mxu0
        %v881 = vadd.f32 0.0, %v880
        %v882 = vpop.f32.mrf.mxu0
        %v883 = vadd.f32 0.0, %v882
        %884 = vdwg.mxu0
        %v885 = vmax.f32 %v867, %v877
        %v886 = vmax.f32 %v871, %v881
        %v887 = vmax.f32 %v885, %v886
        %v888 = vrot.slane %v887, 4
        %v889 = vmax.f32 %v887, %v888
        %v890 = vrot.slane %v889, 2
        %v891 = vmax.f32 %v889, %v890
        %v892 = vrot.slane %v891, 1
        %v893 = vmax.f32 %v891, %v892
        %v894 = vmax.f32 %v869, %v879
        %v895 = vmax.f32 %v873, %v883
        %v896 = vmax.f32 %v894, %v895
        %v897 = vrot.slane %v896, 4
        %v898 = vmax.f32 %v896, %v897
        %v899 = vrot.slane %v898, 2
        %v900 = vmax.f32 %v898, %v899
        %v901 = vrot.slane %v900, 1
        %v902 = vmax.f32 %v900, %v901
        %v903 = vsub.f32 %v867, %v893
        %v904 = vsub.f32 %v869, %v902
        %v905 = vsub.f32 %v871, %v893
        %v906 = vsub.f32 %v873, %v902
        %v907 = vsub.f32 %v877, %v893
        %v908 = vsub.f32 %v879, %v902
        %v909 = vsub.f32 %v881, %v893
        %v910 = vsub.f32 %v883, %v902
        %v911 = vmul.f32 %v903, 1.442695
        %v912 = vpow.pop %v911
        %v913 = vmul.f32 %v904, 1.442695
        %v914 = vpow.pop %v913
        %v915 = vmul.f32 %v905, 1.442695
        %v916 = vpow.pop %v915
        %v917 = vmul.f32 %v906, 1.442695
        %v918 = vpow.pop %v917
        %v919 = vmul.f32 %v907, 1.442695
        %v920 = vpow.pop %v919
        %v921 = vmul.f32 %v908, 1.442695
        %v922 = vpow.pop %v921
        %v923 = vmul.f32 %v909, 1.442695
        %v924 = vpow.pop %v923
        %v925 = vmul.f32 %v910, 1.442695
        %v926 = vpow.pop %v925
        %v927 = vadd.f32 %v912, %v916
        %v928 = vadd.f32 %v927, %v920
        %v929 = vadd.f32 %v928, %v924
        %v930 = vrot.slane %v929, 4
        %v931 = vadd.f32 %v929, %v930
        %v932 = vrot.slane %v931, 2
        %v933 = vadd.f32 %v931, %v932
        %v934 = vrot.slane %v933, 1
        %v935 = vadd.f32 %v933, %v934
        %v936 = vadd.f32 %v914, %v918
        %v937 = vadd.f32 %v936, %v922
        %v938 = vadd.f32 %v937, %v926
        %v939 = vrot.slane %v938, 4
        %v940 = vadd.f32 %v938, %v939
        %v941 = vrot.slane %v940, 2
        %v942 = vadd.f32 %v940, %v941
        %v943 = vrot.slane %v942, 1
        %v944 = vadd.f32 %v942, %v943
        %v945 = vrcp.pop %v935
        %v946 = vrcp.pop %v944
        %v947 = vmul.f32 %v912, %v945
        %v948 = vmul.f32 %v914, %v946
        %v949 = vmul.f32 %v916, %v945
        %v950 = vmul.f32 %v918, %v946
        %v951 = vmul.f32 %v920, %v945
        %v952 = vmul.f32 %v922, %v946
        %v953 = vmul.f32 %v924, %v945
        %v954 = vmul.f32 %v926, %v946
        %v955 = vadd.f32 %v947, %v948
        %956 = vadd.xlane.f32.xlu0 %v955
        %v957 = vpop.xlane.xlu0 %956
        %v958 = vadd.f32 %v949, %v950
        %959 = vadd.xlane.f32.xlu0 %v958
        %v960 = vpop.xlane.xlu0 %959
        %v961 = vadd.f32 %v951, %v952
        %962 = vadd.xlane.f32.xlu0 %v961
        %v963 = vpop.xlane.xlu0 %962
        %v964 = vadd.f32 %v953, %v954
        %965 = vadd.xlane.f32.xlu0 %v964
        %v966 = vpop.xlane.xlu0 %965
        %v967 = vpack.c.bf16 %v949, %v947
        %v968 = vpack.c.bf16 %v950, %v948
        %v969 = vpack.c.bf16 %v953, %v951
        %v970 = vpack.c.bf16 %v954, %v952
        %971 = vmatprep.subr.bf16.mxu0 0
        %972 = vmatpush1.bf16.xpose.msra.mxu0 0
        %973 = vmatprep.subr.bf16.mxu0 0
        %974 = vmatpush1.bf16.xpose.msra.mxu0 0
        %975 = vmatprep.subr.bf16.mxu0 0
        %976 = vmatpush1.bf16.xpose.msra.mxu0 0
        %977 = vmatprep.subr.bf16.mxu0 0
        %978 = vmatpush1.bf16.xpose.msra.mxu0 0
        %979 = vmatprep.subr.bf16.mxu0 %v537
        %980 = vmatpush1.bf16.xpose.msra.mxu0 %v536
        %981 = vmatprep.subr.bf16.mxu0 %v535
        %982 = vmatpush1.bf16.xpose.msra.mxu0 %v534
        %983 = vmatprep.subr.bf16.mxu0 %v533
        %984 = vmatpush1.bf16.xpose.msra.mxu0 %v532
        %985 = vmatprep.subr.bf16.mxu0 %v531
        %986 = vmatpush1.bf16.xpose.msra.mxu0 %v530
        %987 = vmatprep.subr.bf16.mxu0 0
        %988 = vmatpush2.bf16.xpose.msra.mxu0 0
        %989 = vmatprep.subr.bf16.mxu0 0
        %990 = vmatpush2.bf16.xpose.msra.mxu0 0
        %991 = vmatprep.subr.bf16.mxu0 0
        %992 = vmatpush2.bf16.xpose.msra.mxu0 0
        %993 = vmatprep.subr.bf16.mxu0 0
        %994 = vmatpush2.bf16.xpose.msra.mxu0 0
        %995 = vmatprep.subr.bf16.mxu0 0
        %996 = vmatpush2.bf16.xpose.msra.mxu0 0
        %997 = vmatprep.subr.bf16.mxu0 0
        %998 = vmatpush2.bf16.xpose.msra.mxu0 0
        %999 = vmatprep.subr.bf16.mxu0 0
        %1000 = vmatpush2.bf16.xpose.msra.mxu0 0
        %1001 = vmatprep.subr.bf16.mxu0 0
        %1002 = vmatpush2.bf16.xpose.msra.mxu0 0
        %1003 = vmatprep.mubr.bf16.mxu0 %v968
        %1004 = vmatmul.mubr.bf16.gmra.mxu0 %v967
        %v1005 = vpop.f32.mrf.mxu0
        %v1006 = vadd.f32 0.0, %v1005
        %v1007 = vpop.f32.mrf.mxu0
        %v1008 = vpop.f32.mrf.mxu0
        %v1009 = vadd.f32 0.0, %v1008
        %v1010 = vpop.f32.mrf.mxu0
        %1011 = vmatprep.mubr.bf16.mxu0 %v970
        %1012 = vmatmul.mubr.bf16.gmra.mxu0 %v969
        %v1013 = vpop.f32.mrf.mxu0
        %v1014 = vadd.f32 0.0, %v1013
        %v1015 = vpop.f32.mrf.mxu0
        %v1016 = vpop.f32.mrf.mxu0
        %v1017 = vadd.f32 0.0, %v1016
        %v1018 = vpop.f32.mrf.mxu0
        %1019 = vdwg.mxu0
        %v1020 = vadd.f32 %v957, 1e-06
        %v1021 = vadd.f32 %v960, 1e-06
        %v1022 = vadd.f32 %v963, 1e-06
        %v1023 = vadd.f32 %v966, 1e-06
        %v1024 = vrcp.pop %v1020
        %v1025 = vmul.f32 1.0, %v1024
        %v1026 = vrcp.pop %v1021
        %v1027 = vmul.f32 1.0, %v1026
        %v1028 = vrcp.pop %v1022
        %v1029 = vmul.f32 1.0, %v1028
        %v1030 = vrcp.pop %v1023
        %v1031 = vmul.f32 1.0, %v1030
        %v1032 = vmul.f32 %v1006, %v1025
        %v1033 = vmul.f32 %v1009, %v1027
        %v1034 = vmul.f32 %v1014, %v1029
        %v1035 = vmul.f32 %v1017, %v1031
        %v1036 = vmul.f32 %v1032, %v1032
        %v1037 = vmul.f32 %v1033, %v1033
        %v1038 = vmul.f32 %v1034, %v1034
        %v1039 = vmul.f32 %v1035, %v1035
        %v1040 = vsel %vm444, %v1036, 0.0
        %1041 = vadd.xlane.f32.xlu0 %v1040
        %v1042 = vpop.xlane.xlu0 %1041
        %v1043 = vsel %vm444, %v1037, 0.0
        %1044 = vadd.xlane.f32.xlu0 %v1043
        %v1045 = vpop.xlane.xlu0 %1044
        %v1046 = vsel %vm444, %v1038, 0.0
        %1047 = vadd.xlane.f32.xlu0 %v1046
        %v1048 = vpop.xlane.xlu0 %1047
        %v1049 = vsel %vm444, %v1039, 0.0
        %1050 = vadd.xlane.f32.xlu0 %v1049
        %v1051 = vpop.xlane.xlu0 %1050
        %v1052 = vrsqrt.pop %v1042
        %v1053 = vmul.f32 %v1042, %v1052
        %vm1054 = vcmp.eq.f32.partialorder %v1042, inf
        %v1055 = vsel %vm1054, %v1042, %v1053
        %vm1056 = vcmp.eq.f32.partialorder %v1042, 0.0
        %v1057 = vand.u32 %v1042, 2147483648
        %v1058 = vsel %vm1056, %v1057, %v1055
        %v1059 = vrsqrt.pop %v1045
        %v1060 = vmul.f32 %v1045, %v1059
        %vm1061 = vcmp.eq.f32.partialorder %v1045, inf
        %v1062 = vsel %vm1061, %v1045, %v1060
        %vm1063 = vcmp.eq.f32.partialorder %v1045, 0.0
        %v1064 = vand.u32 %v1045, 2147483648
        %v1065 = vsel %vm1063, %v1064, %v1062
        %v1066 = vrsqrt.pop %v1048
        %v1067 = vmul.f32 %v1048, %v1066
        %vm1068 = vcmp.eq.f32.partialorder %v1048, inf
        %v1069 = vsel %vm1068, %v1048, %v1067
        %vm1070 = vcmp.eq.f32.partialorder %v1048, 0.0
        %v1071 = vand.u32 %v1048, 2147483648
        %v1072 = vsel %vm1070, %v1071, %v1069
        %v1073 = vrsqrt.pop %v1051
        %v1074 = vmul.f32 %v1051, %v1073
        %vm1075 = vcmp.eq.f32.partialorder %v1051, inf
        %v1076 = vsel %vm1075, %v1051, %v1074
        %vm1077 = vcmp.eq.f32.partialorder %v1051, 0.0
        %v1078 = vand.u32 %v1051, 2147483648
        %v1079 = vsel %vm1077, %v1078, %v1076
        %v1080 = vadd.f32 %v1058, 1e-06
        %v1081 = vadd.f32 %v1065, 1e-06
        %v1082 = vadd.f32 %v1072, 1e-06
        %v1083 = vadd.f32 %v1079, 1e-06
        %v1084 = vrcp.pop %v1080
        %v1085 = vmul.f32 1.0, %v1084
        %v1086 = vrcp.pop %v1081
        %v1087 = vmul.f32 1.0, %v1086
        %v1088 = vrcp.pop %v1082
        %v1089 = vmul.f32 1.0, %v1088
        %v1090 = vrcp.pop %v1083
        %v1091 = vmul.f32 1.0, %v1090
        %v1092 = vmul.f32 %v1032, %v1085
        %v1093 = vmul.f32 %v1033, %v1087
        %v1094 = vmul.f32 %v1034, %v1089
        %v1095 = vmul.f32 %v1035, %v1091
        %1096 = vxpose.xlu0.b32.start [1/16] %v1092, 128
        %1097 = vxpose.xlu0.b32.cont [2/16] %v1093, 128
        %1098 = vxpose.xlu0.b32.cont [3/16] %v1094, 128
        %1099 = vxpose.xlu0.b32.cont [4/16] %v1095, 128
        %1100 = vxpose.xlu0.b32.cont [5/16] 0.0, 128
        %1101 = vxpose.xlu0.b32.cont [6/16] 0.0, 128
        %1102 = vxpose.xlu0.b32.cont [7/16] 0.0, 128
        %1103 = vxpose.xlu0.b32.cont [8/16] 0.0, 128
        %1104 = vxpose.xlu0.b32.cont [9/16] 0.0, 128
        %1105 = vxpose.xlu0.b32.cont [10/16] 0.0, 128
        %1106 = vxpose.xlu0.b32.cont [11/16] 0.0, 128
        %1107 = vxpose.xlu0.b32.cont [12/16] 0.0, 128
        %1108 = vxpose.xlu0.b32.cont [13/16] 0.0, 128
        %1109 = vxpose.xlu0.b32.cont [14/16] 0.0, 128
        %1110 = vxpose.xlu0.b32.cont [15/16] 0.0, 128
        %1111 = vxpose.xlu0.b32.end [16/16] 0.0, 128
        %v1112 = vpop.trf.xlu0
        %v1113 = vpop.trf.xlu0
        %v1114 = vpop.trf.xlu0
        %v1115 = vpop.trf.xlu0
        %v1116 = vpop.trf.xlu0
        %v1117 = vpop.trf.xlu0
        %v1118 = vpop.trf.xlu0
        %v1119 = vpop.trf.xlu0
        %v1120 = vpop.trf.xlu0
        %v1121 = vpop.trf.xlu0
        %v1122 = vpop.trf.xlu0
        %v1123 = vpop.trf.xlu0
        %v1124 = vpop.trf.xlu0
        %v1125 = vpop.trf.xlu0
        %v1126 = vpop.trf.xlu0
        %v1127 = vpop.trf.xlu0
        %v1128 = vpack.c.bf16 %v1113, %v1112
        %v1129 = vpack.c.bf16 %v1115, %v1114
        %v1130 = vpack.c.bf16 %v1117, %v1116
        %v1131 = vpack.c.bf16 %v1119, %v1118
        %vm1132 = vcmask 261120
        %v1134 = vsel %vm1132, %v1128, 0
        %v1137 = vsel %vm1132, %v1129, 0
        %v1140 = vsel %vm1132, %v1130, 0
        %v1143 = vsel %vm1132, %v1131, 0
        %1145 = vmatprep.subr.bf16.mxu0 0
        %1146 = vmatpush1.bf16.msra.mxu0 0
        %1147 = vmatprep.subr.bf16.mxu0 0
        %1148 = vmatpush1.bf16.msra.mxu0 0
        %1149 = vmatprep.subr.bf16.mxu0 0
        %1150 = vmatpush1.bf16.msra.mxu0 0
        %1151 = vmatprep.subr.bf16.mxu0 0
        %1152 = vmatpush1.bf16.msra.mxu0 0
        %1153 = vmatprep.subr.bf16.mxu0 0
        %1154 = vmatpush1.bf16.msra.mxu0 0
        %1155 = vmatprep.subr.bf16.mxu0 0
        %1156 = vmatpush1.bf16.msra.mxu0 0
        %1157 = vmatprep.subr.bf16.mxu0 %v970
        %1158 = vmatpush1.bf16.msra.mxu0 %v969
        %1159 = vmatprep.subr.bf16.mxu0 %v968
        %1160 = vmatpush1.bf16.msra.mxu0 %v967
        %1161 = vmatprep.subr.bf16.mxu0 0
        %1162 = vmatpush2.bf16.msra.mxu0 0
        %1163 = vmatprep.subr.bf16.mxu0 0
        %1164 = vmatpush2.bf16.msra.mxu0 0
        %1165 = vmatprep.subr.bf16.mxu0 0
        %1166 = vmatpush2.bf16.msra.mxu0 0
        %1167 = vmatprep.subr.bf16.mxu0 0
        %1168 = vmatpush2.bf16.msra.mxu0 0
        %1169 = vmatprep.subr.bf16.mxu0 0
        %1170 = vmatpush2.bf16.msra.mxu0 0
        %1171 = vmatprep.subr.bf16.mxu0 0
        %1172 = vmatpush2.bf16.msra.mxu0 0
        %1173 = vmatprep.subr.bf16.mxu0 0
        %1174 = vmatpush2.bf16.msra.mxu0 0
        %1175 = vmatprep.subr.bf16.mxu0 0
        %1176 = vmatpush2.bf16.msra.mxu0 0
        %1177 = vmatprep.mubr.bf16.mxu0 0
        %1178 = vmatmul.mubr.bf16.gmra.mxu0 %v1134
        %v1179 = vpop.f32.mrf.mxu0
        %v1180 = vadd.f32 0.0, %v1179
        %v1181 = vpop.f32.mrf.mxu0
        %v1182 = vadd.f32 0.0, %v1181
        %v1183 = vpop.f32.mrf.mxu0
        %v1184 = vadd.f32 0.0, %v1183
        %v1185 = vpop.f32.mrf.mxu0
        %v1186 = vadd.f32 0.0, %v1185
        %1187 = vmatprep.mubr.bf16.mxu0 0
        %1188 = vmatmul.mubr.bf16.gmra.mxu0 %v1137
        %v1189 = vpop.f32.mrf.mxu0
        %v1190 = vadd.f32 0.0, %v1189
        %v1191 = vpop.f32.mrf.mxu0
        %v1192 = vadd.f32 0.0, %v1191
        %v1193 = vpop.f32.mrf.mxu0
        %v1194 = vadd.f32 0.0, %v1193
        %v1195 = vpop.f32.mrf.mxu0
        %v1196 = vadd.f32 0.0, %v1195
        %1197 = vmatprep.mubr.bf16.mxu0 0
        %1198 = vmatmul.mubr.bf16.gmra.mxu0 %v1140
        %v1199 = vpop.f32.mrf.mxu0
        %v1200 = vadd.f32 0.0, %v1199
        %v1201 = vpop.f32.mrf.mxu0
        %v1202 = vadd.f32 0.0, %v1201
        %v1203 = vpop.f32.mrf.mxu0
        %v1204 = vadd.f32 0.0, %v1203
        %v1205 = vpop.f32.mrf.mxu0
        %v1206 = vadd.f32 0.0, %v1205
        %1207 = vmatprep.mubr.bf16.mxu0 0
        %1208 = vmatmul.mubr.bf16.gmra.mxu0 %v1143
        %v1209 = vpop.f32.mrf.mxu0
        %v1210 = vadd.f32 0.0, %v1209
        %v1211 = vpop.f32.mrf.mxu0
        %v1212 = vadd.f32 0.0, %v1211
        %v1213 = vpop.f32.mrf.mxu0
        %v1214 = vadd.f32 0.0, %v1213
        %v1215 = vpop.f32.mrf.mxu0
        %v1216 = vadd.f32 0.0, %v1215
        %1217 = vdwg.mxu0
        %v1218 = vmax.f32 %v1180, 0.0
        %v1219 = vmax.f32 %v1182, 0.0
        %v1220 = vmax.f32 %v1184, 0.0
        %v1221 = vmax.f32 %v1186, 0.0
        %v1222 = vmax.f32 %v1190, 0.0
        %v1223 = vmax.f32 %v1192, 0.0
        %v1224 = vmax.f32 %v1194, 0.0
        %v1225 = vmax.f32 %v1196, 0.0
        %v1226 = vmax.f32 %v1200, 0.0
        %v1227 = vmax.f32 %v1202, 0.0
        %v1228 = vmax.f32 %v1204, 0.0
        %v1229 = vmax.f32 %v1206, 0.0
        %v1230 = vmax.f32 %v1210, 0.0
        %v1231 = vmax.f32 %v1212, 0.0
        %v1232 = vmax.f32 %v1214, 0.0
        %v1233 = vmax.f32 %v1216, 0.0
        %v1234 = vpack.c.bf16 %v1220, %v1218
        %v1235 = vpack.c.bf16 %v1221, %v1219
        %v1236 = vpack.c.bf16 %v1224, %v1222
        %v1237 = vpack.c.bf16 %v1225, %v1223
        %v1238 = vpack.c.bf16 %v1228, %v1226
        %v1239 = vpack.c.bf16 %v1229, %v1227
        %v1240 = vpack.c.bf16 %v1232, %v1230
        %v1241 = vpack.c.bf16 %v1233, %v1231
        %v1250 = vunpack.c.l.b16 %v360
        %v1251 = vunpack.c.l.b16 %v361
        %v1252 = vunpack.c.l.b16 %v362
        %v1253 = vunpack.c.l.b16 %v363
        %v1254 = vunpack.c.l.b16 %v364
        %v1255 = vunpack.c.l.b16 %v365
        %v1256 = vunpack.c.l.b16 %v366
        %v1257 = vunpack.c.l.b16 %v367
        %v1258 = vpack.c.b16 %v1251, %v1250
        %v1259 = vpack.c.b16 %v1253, %v1252
        %v1260 = vpack.c.b16 %v1255, %v1254
        %v1261 = vpack.c.b16 %v1257, %v1256
        %v1263 = vsel %vm444, %v1258, 0
        %v1266 = vsel %vm444, %v1259, 0
        %v1269 = vsel %vm444, %v1260, 0
        %v1272 = vsel %vm444, %v1261, 0
        %1274 = vmatprep.subr.bf16.mxu0 0
        %1275 = vmatpush1.bf16.msra.mxu0 0
        %1276 = vmatprep.subr.bf16.mxu0 0
        %1277 = vmatpush1.bf16.msra.mxu0 0
        %1278 = vmatprep.subr.bf16.mxu0 0
        %1279 = vmatpush1.bf16.msra.mxu0 0
        %1280 = vmatprep.subr.bf16.mxu0 0
        %1281 = vmatpush1.bf16.msra.mxu0 0
        %1282 = vmatprep.subr.bf16.mxu0 %v1241
        %1283 = vmatpush1.bf16.msra.mxu0 %v1240
        %1284 = vmatprep.subr.bf16.mxu0 %v1239
        %1285 = vmatpush1.bf16.msra.mxu0 %v1238
        %1286 = vmatprep.subr.bf16.mxu0 %v1237
        %1287 = vmatpush1.bf16.msra.mxu0 %v1236
        %1288 = vmatprep.subr.bf16.mxu0 %v1235
        %1289 = vmatpush1.bf16.msra.mxu0 %v1234
        %1290 = vmatprep.subr.bf16.mxu0 0
        %1291 = vmatpush2.bf16.msra.mxu0 0
        %1292 = vmatprep.subr.bf16.mxu0 0
        %1293 = vmatpush2.bf16.msra.mxu0 0
        %1294 = vmatprep.subr.bf16.mxu0 0
        %1295 = vmatpush2.bf16.msra.mxu0 0
        %1296 = vmatprep.subr.bf16.mxu0 0
        %1297 = vmatpush2.bf16.msra.mxu0 0
        %1298 = vmatprep.subr.bf16.mxu0 0
        %1299 = vmatpush2.bf16.msra.mxu0 0
        %1300 = vmatprep.subr.bf16.mxu0 0
        %1301 = vmatpush2.bf16.msra.mxu0 0
        %1302 = vmatprep.subr.bf16.mxu0 0
        %1303 = vmatpush2.bf16.msra.mxu0 0
        %1304 = vmatprep.subr.bf16.mxu0 0
        %1305 = vmatpush2.bf16.msra.mxu0 0
        %1306 = vmatprep.mubr.bf16.mxu0 0
        %1307 = vmatmul.mubr.bf16.gmra.mxu0 %v1263
        %v1308 = vpop.f32.mrf.mxu0
        %v1309 = vadd.f32 0.0, %v1308
        %v1310 = vpop.f32.mrf.mxu0
        %v1311 = vadd.f32 0.0, %v1310
        %v1312 = vpop.f32.mrf.mxu0
        %v1313 = vadd.f32 0.0, %v1312
        %v1314 = vpop.f32.mrf.mxu0
        %v1315 = vadd.f32 0.0, %v1314
        %1316 = vmatprep.mubr.bf16.mxu0 0
        %1317 = vmatmul.mubr.bf16.gmra.mxu0 %v1266
        %v1318 = vpop.f32.mrf.mxu0
        %v1319 = vadd.f32 0.0, %v1318
        %v1320 = vpop.f32.mrf.mxu0
        %v1321 = vadd.f32 0.0, %v1320
        %v1322 = vpop.f32.mrf.mxu0
        %v1323 = vadd.f32 0.0, %v1322
        %v1324 = vpop.f32.mrf.mxu0
        %v1325 = vadd.f32 0.0, %v1324
        %1326 = vmatprep.mubr.bf16.mxu0 0
        %1327 = vmatmul.mubr.bf16.gmra.mxu0 %v1269
        %v1328 = vpop.f32.mrf.mxu0
        %v1329 = vadd.f32 0.0, %v1328
        %v1330 = vpop.f32.mrf.mxu0
        %v1331 = vadd.f32 0.0, %v1330
        %v1332 = vpop.f32.mrf.mxu0
        %v1333 = vadd.f32 0.0, %v1332
        %v1334 = vpop.f32.mrf.mxu0
        %v1335 = vadd.f32 0.0, %v1334
        %1336 = vmatprep.mubr.bf16.mxu0 0
        %1337 = vmatmul.mubr.bf16.gmra.mxu0 %v1272
        %v1338 = vpop.f32.mrf.mxu0
        %v1339 = vadd.f32 0.0, %v1338
        %v1340 = vpop.f32.mrf.mxu0
        %v1341 = vadd.f32 0.0, %v1340
        %v1342 = vpop.f32.mrf.mxu0
        %v1343 = vadd.f32 0.0, %v1342
        %v1344 = vpop.f32.mrf.mxu0
        %v1345 = vadd.f32 0.0, %v1344
        %1346 = vdwg.mxu0
        %v1347 = vld [vmem:[%s4] sm:$0xff]
        %v1348 = vld [vmem:[%s4 + $0x8] sm:$0xff]
        %v1349 = vld [vmem:[%s4 + $0x10] sm:$0xff]
        %v1350 = vld [vmem:[%s4 + $0x18] sm:$0xff]
        %v1351 = vld [vmem:[%s4 + $0x20] sm:$0xff]
        %v1352 = vld [vmem:[%s4 + $0x28] sm:$0xff]
        %v1353 = vld [vmem:[%s4 + $0x30] sm:$0xff]
        %v1354 = vld [vmem:[%s4 + $0x38] sm:$0xff]
        %1356 = vset.pattern.permute.xlu0 0
        %1357 = vperm.xlu0 %1356, %v1347
        %v1358 = vpop.permute.xlu0 %1357
        %1361 = vset.pattern.permute.xlu0 0
        %1362 = vperm.xlu0 %1361, %v1348
        %v1363 = vpop.permute.xlu0 %1362
        %1366 = vset.pattern.permute.xlu0 0
        %1367 = vperm.xlu0 %1366, %v1349
        %v1368 = vpop.permute.xlu0 %1367
        %1371 = vset.pattern.permute.xlu0 0
        %1372 = vperm.xlu0 %1371, %v1350
        %v1373 = vpop.permute.xlu0 %1372
        %1376 = vset.pattern.permute.xlu0 0
        %1377 = vperm.xlu0 %1376, %v1351
        %v1378 = vpop.permute.xlu0 %1377
        %1381 = vset.pattern.permute.xlu0 0
        %1382 = vperm.xlu0 %1381, %v1352
        %v1383 = vpop.permute.xlu0 %1382
        %1386 = vset.pattern.permute.xlu0 0
        %1387 = vperm.xlu0 %1386, %v1353
        %v1388 = vpop.permute.xlu0 %1387
        %1391 = vset.pattern.permute.xlu0 0
        %1392 = vperm.xlu0 %1391, %v1354
        %v1393 = vpop.permute.xlu0 %1392
        %v1395 = vmul.f32 %v1309, %v1358
        %v1396 = vmul.f32 %v1311, %v1358
        %v1397 = vmul.f32 %v1313, %v1363
        %v1398 = vmul.f32 %v1315, %v1363
        %v1399 = vmul.f32 %v1319, %v1368
        %v1400 = vmul.f32 %v1321, %v1368
        %v1401 = vmul.f32 %v1323, %v1373
        %v1402 = vmul.f32 %v1325, %v1373
        %v1403 = vmul.f32 %v1329, %v1378
        %v1404 = vmul.f32 %v1331, %v1378
        %v1405 = vmul.f32 %v1333, %v1383
        %v1406 = vmul.f32 %v1335, %v1383
        %v1407 = vmul.f32 %v1339, %v1388
        %v1408 = vmul.f32 %v1341, %v1388
        %v1409 = vmul.f32 %v1343, %v1393
        %v1410 = vmul.f32 %v1345, %v1393
        %v1411 = vld [vmem:[%s5] sm:$0xff]
        %v1412 = vld [vmem:[%s5 + $0x8] sm:$0xff]
        %v1413 = vld [vmem:[%s5 + $0x10] sm:$0xff]
        %v1414 = vld [vmem:[%s5 + $0x18] sm:$0xff]
        %v1415 = vld [vmem:[%s5 + $0x20] sm:$0xff]
        %v1416 = vld [vmem:[%s5 + $0x28] sm:$0xff]
        %v1417 = vld [vmem:[%s5 + $0x30] sm:$0xff]
        %v1418 = vld [vmem:[%s5 + $0x38] sm:$0xff]
        %1420 = vset.pattern.permute.xlu0 0
        %1421 = vperm.xlu0 %1420, %v1411
        %v1422 = vpop.permute.xlu0 %1421
        %1425 = vset.pattern.permute.xlu0 0
        %1426 = vperm.xlu0 %1425, %v1412
        %v1427 = vpop.permute.xlu0 %1426
        %1430 = vset.pattern.permute.xlu0 0
        %1431 = vperm.xlu0 %1430, %v1413
        %v1432 = vpop.permute.xlu0 %1431
        %1435 = vset.pattern.permute.xlu0 0
        %1436 = vperm.xlu0 %1435, %v1414
        %v1437 = vpop.permute.xlu0 %1436
        %1440 = vset.pattern.permute.xlu0 0
        %1441 = vperm.xlu0 %1440, %v1415
        %v1442 = vpop.permute.xlu0 %1441
        %1445 = vset.pattern.permute.xlu0 0
        %1446 = vperm.xlu0 %1445, %v1416
        %v1447 = vpop.permute.xlu0 %1446
        %1450 = vset.pattern.permute.xlu0 0
        %1451 = vperm.xlu0 %1450, %v1417
        %v1452 = vpop.permute.xlu0 %1451
        %1455 = vset.pattern.permute.xlu0 0
        %1456 = vperm.xlu0 %1455, %v1418
        %v1457 = vpop.permute.xlu0 %1456
        %v1459 = vadd.f32 %v1395, %v1422
        %v1460 = vadd.f32 %v1396, %v1422
        %v1461 = vadd.f32 %v1397, %v1427
        %v1462 = vadd.f32 %v1398, %v1427
        %v1463 = vadd.f32 %v1399, %v1432
        %v1464 = vadd.f32 %v1400, %v1432
        %v1465 = vadd.f32 %v1401, %v1437
        %v1466 = vadd.f32 %v1402, %v1437
        %v1467 = vadd.f32 %v1403, %v1442
        %v1468 = vadd.f32 %v1404, %v1442
        %v1469 = vadd.f32 %v1405, %v1447
        %v1470 = vadd.f32 %v1406, %v1447
        %v1471 = vadd.f32 %v1407, %v1452
        %v1472 = vadd.f32 %v1408, %v1452
        %v1473 = vadd.f32 %v1409, %v1457
        %v1474 = vadd.f32 %v1410, %v1457
        %v1475 = vadd.f32 %v1459, %v336
        %v1476 = vadd.f32 %v1460, %v337
        %v1477 = vadd.f32 %v1461, %v338
        %v1478 = vadd.f32 %v1462, %v339
        %v1479 = vadd.f32 %v1463, %v340
        %v1480 = vadd.f32 %v1464, %v341
        %v1481 = vadd.f32 %v1465, %v342
        %v1482 = vadd.f32 %v1466, %v343
        %v1483 = vadd.f32 %v1467, %v344
        %v1484 = vadd.f32 %v1468, %v345
        %v1485 = vadd.f32 %v1469, %v346
        %v1486 = vadd.f32 %v1470, %v347
        %v1487 = vadd.f32 %v1471, %v348
        %v1488 = vadd.f32 %v1472, %v349
        %v1489 = vadd.f32 %v1473, %v350
        %v1490 = vadd.f32 %v1474, %v351
        %v1491 = vmax.f32 %v1475, 0.0
        %v1492 = vmax.f32 %v1476, 0.0
        %v1493 = vmax.f32 %v1477, 0.0
        %v1494 = vmax.f32 %v1478, 0.0
        %v1495 = vmax.f32 %v1479, 0.0
        %v1496 = vmax.f32 %v1480, 0.0
        %v1497 = vmax.f32 %v1481, 0.0
        %v1498 = vmax.f32 %v1482, 0.0
        %v1499 = vmax.f32 %v1483, 0.0
        %v1500 = vmax.f32 %v1484, 0.0
        %v1501 = vmax.f32 %v1485, 0.0
        %v1502 = vmax.f32 %v1486, 0.0
        %v1503 = vmax.f32 %v1487, 0.0
        %v1504 = vmax.f32 %v1488, 0.0
        %v1505 = vmax.f32 %v1489, 0.0
        %v1506 = vmax.f32 %v1490, 0.0
        %1507 = vst [vmem:[%s327] sm:$0xff] %v1491
        %1508 = vst [vmem:[%s327 + $0x8] sm:$0xff] %v1492
        %1509 = vst [vmem:[%s327 + $0x10] sm:$0xff] %v1493
        %1510 = vst [vmem:[%s327 + $0x18] sm:$0xff] %v1494
        %1511 = vst [vmem:[%s327 + $0x20] sm:$0xff] %v1495
        %1512 = vst [vmem:[%s327 + $0x28] sm:$0xff] %v1496
        %1513 = vst [vmem:[%s327 + $0x30] sm:$0xff] %v1497
        %1514 = vst [vmem:[%s327 + $0x38] sm:$0xff] %v1498
        %1515 = vst [vmem:[%s327 + $0x40] sm:$0xff] %v1499
        %1516 = vst [vmem:[%s327 + $0x48] sm:$0xff] %v1500
        %1517 = vst [vmem:[%s327 + $0x50] sm:$0xff] %v1501
        %1518 = vst [vmem:[%s327 + $0x58] sm:$0xff] %v1502
        %1519 = vst [vmem:[%s327 + $0x60] sm:$0xff] %v1503
        %1520 = vst [vmem:[%s327 + $0x68] sm:$0xff] %v1504
        %1521 = vst [vmem:[%s327 + $0x70] sm:$0xff] %v1505
        %1522 = vst [vmem:[%s327 + $0x78] sm:$0xff] %v1506
        %1523 = vst [vmem:[%s334] sm:$0xff] %v947
        %1524 = vst [vmem:[%s334 + $0x8] sm:$0xff] %v948
        %1525 = vst [vmem:[%s334 + $0x10] sm:$0xff] %v949
        %1526 = vst [vmem:[%s334 + $0x18] sm:$0xff] %v950
        %1527 = vst [vmem:[%s334 + $0x20] sm:$0xff] %v951
        %1528 = vst [vmem:[%s334 + $0x28] sm:$0xff] %v952
        %1529 = vst [vmem:[%s334 + $0x30] sm:$0xff] %v953
        %1530 = vst [vmem:[%s334 + $0x38] sm:$0xff] %v954
        %s1531 = sand.u32 %s189, 1
        %s1532 = scalar_lea.sflag [#allocation4], %s1531
        %s1533 = sand.u32 %s189, 1
        %s1534 = smul.addr %s1533, 128
        %s1535 = scalar_lea.vmem [#allocation5], %s1534
        %s1536 = sand.u32 %s215, 1
        %s1537 = scalar_lea.sflag [#allocation7], %s1536
        %s1538 = sand.u32 %s215, 1
        %s1539 = smul.addr %s1538, 64
        %s1540 = scalar_lea.vmem [#allocation6], %s1539
        // Predicated region
        $region60: #{tpu_custom_call.1} parent=47 // pred_check
          %p1541 = pneg %p199
        $region61: #{tpu_custom_call.1} parent=47 // pred_check_branch
          %1543 = sbr.rel (%p1541) target = $region63
        $region62: #{tpu_custom_call.1} parent=47 // pred_region
          %s1545 = ssub.s32 2048, 2048
          %1546 = vsyncadd %s1532, %s1545
          %s1547 = smul.addr %s29, 16
          %s1548 = smul.addr %s1547, 128
          %s1549 = scalar_lea.hbm %s7, %s1548
          %s1550 = sshll.u32 %s1535, 4
          %s1551 = int_to_ptr.vmem [resolvable:$true] %s1550
          %1556 = dma.vmem_to_hbm [thread:$0]  %s1551, 2048, %s1549, %s1532, 256, 256, 16
        $region63: #{tpu_custom_call.1} parent=47 // pred_fallthru
          _
        // Predicated region
        $region64: #{tpu_custom_call.1} parent=47 // pred_check
          %p1557 = pneg %p225
        $region65: #{tpu_custom_call.1} parent=47 // pred_check_branch
          %1559 = sbr.rel (%p1557) target = $region67
        $region66: #{tpu_custom_call.1} parent=47 // pred_region
          %s1561 = ssub.s32 1024, 1024
          %1562 = vsyncadd %s1537, %s1561
          %s1563 = smul.addr %s29, 8
          %s1564 = smul.addr %s1563, 128
          %s1565 = scalar_lea.hbm %s8, %s1564
          %s1566 = sshll.u32 %s1540, 4
          %s1567 = int_to_ptr.vmem [resolvable:$true] %s1566
          %1572 = dma.vmem_to_hbm [thread:$0]  %s1567, 1024, %s1565, %s1537, 256, 256, 16
        $region67: #{tpu_custom_call.1} parent=47 // pred_fallthru
          _
      $region48: #{tpu_custom_call.1} parent=5 // pred_fallthru
        _
      %p1573 = scmp.le.s32.totalorder 2, %s24
      // Predicated region
      $region68: #{tpu_custom_call.1} parent=5 // pred_check
        %p1574 = pneg %p1573
      $region69: #{tpu_custom_call.1} parent=5 // pred_check_branch
        %1576 = sbr.rel (%p1574) target = $region71
      $region70: #{tpu_custom_call.1} parent=5 // pred_region
        %s1577 = ssub.s32 %s24, 2
        // Predicated region
        $region72: #{tpu_custom_call.1} parent=70 // pred_check
          %p1578 = pneg %p205
        $region73: #{tpu_custom_call.1} parent=70 // pred_check_branch
          %1580 = sbr.rel (%p1578) target = $region75
        $region74: #{tpu_custom_call.1} parent=70 // pred_region
          %s1581 = sand.u32 %s190, 1
          %s1582 = scalar_lea.sflag [#allocation4], %s1581
          %s1583 = sand.u32 %s190, 1
          %s1584 = smul.addr %s1583, 128
          %s1585 = scalar_lea.vmem [#allocation5], %s1584
          %1586 = dma.done %s1582, 2048
        $region75: #{tpu_custom_call.1} parent=70 // pred_fallthru
          _
        // Predicated region
        $region76: #{tpu_custom_call.1} parent=70 // pred_check
          %p1587 = pneg %p231
        $region77: #{tpu_custom_call.1} parent=70 // pred_check_branch
          %1589 = sbr.rel (%p1587) target = $region79
        $region78: #{tpu_custom_call.1} parent=70 // pred_region
          %s1590 = sand.u32 %s216, 1
          %s1591 = scalar_lea.sflag [#allocation7], %s1590
          %s1592 = sand.u32 %s216, 1
          %s1593 = smul.addr %s1592, 64
          %s1594 = scalar_lea.vmem [#allocation6], %s1593
          %1595 = dma.done %s1591, 1024
        $region79: #{tpu_custom_call.1} parent=70 // pred_fallthru
          _
      $region71: #{tpu_custom_call.1} parent=5 // pred_fallthru
        _
    $region6: #{tpu_custom_call.1} parent=1 // loop_footer
      %s28 = sadd.s32 1, %s24
    $region7: #{tpu_custom_call.1} parent=1 // loop_footer_branch
      %23 = sbr.rel target = $region3
    $region8: #{tpu_custom_call.1} parent=1 // loop_exit
      _
    %1596 = vsyncpa [#allocation3], 1
    %s1597 = scalar_lea.sflag [#allocation3], 1
    %1598 = vsyncpa %s1597, 1
    %1599 = vsyncpa [#allocation4], 1
    %s1600 = scalar_lea.sflag [#allocation4], 1
    %1601 = vsyncpa %s1600, 1
    %1602 = vsyncpa [#allocation7], 1
    %s1603 = scalar_lea.sflag [#allocation7], 1
    %1604 = vsyncpa %s1603, 1

</llo_original>
